<compile_context>
chip_gen: v7x
topology: tpu7x:2x2x1
jax: 0.10.0
libtpu: 0.0.40
codegen_flags: <defaults>
</compile_context>

<pallas_src>
import functools

import jax
import jax.numpy as jnp
from jax.experimental import pallas as pl
from jax.experimental.pallas import tpu as pltpu

EPS = 1e-5


def bn_relu_conv1x1_kernel(x_ref, gamma_ref, beta_ref, w_ref, o_ref):
    # x_ref:     [Cin, M]        f32   (M = N*H*W, resident across the grid)
    # gamma_ref: [Cin, 1]        f32   (resident)
    # beta_ref:  [Cin, 1]        f32   (resident)
    # w_ref:     [Cout_blk, Cin] bf16  (pipelined per grid step)
    # o_ref:     [Cout_blk, M]         (pipelined per grid step)
    x = x_ref[...]
    inv_m = 1.0 / float(x.shape[1])

    # One-pass batch statistics over N*H*W (both reductions from the same x read).
    # Biased variance, matching PyTorch training-mode BatchNorm2d normalization.
    s1 = jnp.sum(x, axis=1, keepdims=True)          # [Cin, 1]
    s2 = jnp.sum(x * x, axis=1, keepdims=True)      # [Cin, 1]
    mean = s1 * inv_m
    var = s2 * inv_m - mean * mean

    # Fold BN affine into a single per-channel scale + shift; rsqrt -> EUP slot.
    scale = gamma_ref[...] * jax.lax.rsqrt(var + EPS)   # [Cin, 1]
    shift = beta_ref[...] - mean * scale                # [Cin, 1]
    y = jnp.maximum(x * scale + shift, 0.0)             # BN + ReLU (single VPU pass)

    # 1x1 conv == matmul on the MXU: [Cout_blk, Cin] @ [Cin, M], bf16 x bf16 -> f32.
    o_ref[...] = jnp.dot(
        w_ref[...],
        y.astype(jnp.bfloat16),
        preferred_element_type=jnp.float32,
    ).astype(o_ref.dtype)


def _num_cout_blocks(cout):
    """Cout blocking: 4 on v7x (2 steps per TensorCore => cross-core split + intra-core
    pipelining), 2 on v5e/v6e (pipeline weight-in / writeback against compute while
    keeping the ~0.35 us per-step fixed overhead low)."""
    try:
        kind = jax.devices()[0].device_kind.lower()
    except Exception:
        kind = ""
    n = 4 if ("v7" in kind or "7x" in kind) else 2
    while n > 1 and (cout % n != 0 or (cout // n) % 8 != 0):
        n //= 2
    return max(n, 1)


@functools.partial(jax.jit, static_argnames=("out_dtype",))
def bn_relu_conv1x1(x_nchw, gamma, beta, conv_w, out_dtype=jnp.float32):
    """x_nchw: [N, Cin, H, W]; conv_w: [Cout, Cin, 1, 1] (PyTorch layout)."""
    n, cin, h, w = x_nchw.shape
    cout = conv_w.shape[0]
    m = n * h * w

    # NCHW -> [Cin, M].  For N == 1 this is a pure reshape (no data movement).
    if n == 1:
        x2d = x_nchw.reshape(cin, m)
    else:
        # TODO(synk): for N > 1 this transpose is real data movement; revisit layout
        # if batch grows.
        x2d = jnp.transpose(x_nchw, (1, 0, 2, 3)).reshape(cin, m)
    x2d = x2d.astype(jnp.float32)

    # Conv weight in native [Cout, Cin] layout, shipped as bf16 to halve its DMA.
    w2d = conv_w.reshape(cout, cin).astype(jnp.bfloat16)
    gamma2d = gamma.reshape(cin, 1).astype(jnp.float32)
    beta2d = beta.reshape(cin, 1).astype(jnp.float32)

    n_blk = _num_cout_blocks(cout)
    cout_blk = cout // n_blk

    out_bytes = cout * m * jnp.dtype(out_dtype).itemsize
    cost = pl.CostEstimate(
        flops=2 * cout * cin * m + 5 * cin * m,          # matmul + BN/ReLU passes
        transcendentals=cin,                             # rsqrt per channel
        bytes_accessed=(cin * m * 4) + (cout * cin * 2) + (2 * cin * 4) + out_bytes,
    )

    out2d = pl.pallas_call(
        bn_relu_conv1x1_kernel,
        out_shape=jax.ShapeDtypeStruct((cout, m), out_dtype),
        grid=(n_blk,),
        in_specs=[
            pl.BlockSpec((cin, m), lambda i: (0, 0)),         # x (resident, 1 DMA)
            pl.BlockSpec((cin, 1), lambda i: (0, 0)),         # gamma (resident)
            pl.BlockSpec((cin, 1), lambda i: (0, 0)),         # beta (resident)
            pl.BlockSpec((cout_blk, cin), lambda i: (i, 0)),  # weight slab (pipelined)
        ],
        out_specs=pl.BlockSpec((cout_blk, m), lambda i: (i, 0)),
        compiler_params=pltpu.CompilerParams(
            dimension_semantics=("parallel",)),
        cost_estimate=cost,
    )(x2d, gamma2d, beta2d, w2d)

    # [Cout, M] -> NCHW.  For N == 1 this is again a pure reshape.
    if n == 1:
        return out2d.reshape(1, cout, h, w)
    return jnp.transpose(out2d.reshape(cout, n, h, w), (1, 0, 2, 3))


def reference(x_nchw, gamma, beta, conv_w):
    """Pure-JAX f32 reference mirroring PyTorch training-mode BN + ReLU + 1x1 conv."""
    mean = jnp.mean(x_nchw, axis=(0, 2, 3), keepdims=True)
    var = jnp.mean((x_nchw - mean) ** 2, axis=(0, 2, 3), keepdims=True)
    y = (x_nchw - mean) * jax.lax.rsqrt(var + EPS)
    y = y * gamma.reshape(1, -1, 1, 1) + beta.reshape(1, -1, 1, 1)
    y = jnp.maximum(y, 0.0)
    w2d = conv_w.reshape(conv_w.shape[0], conv_w.shape[1])  # [Cout, Cin]
    return jnp.einsum("nchw,oc->nohw", y, w2d)


if __name__ == "__main__":
    key = jax.random.PRNGKey(0)
    k_x, k_w = jax.random.split(key, 2)

    N, CIN, H, W = 1, 256, 14, 14
    COUT = 1024

    x = jax.random.normal(k_x, (N, CIN, H, W), dtype=jnp.float32)

    # BatchNorm2d(256): gamma=1, beta=0 (PyTorch default init)
    # Conv2d(256, 1024, 1x1, bias=False): small random weights
    gamma = jnp.ones((CIN,), dtype=jnp.float32)
    beta = jnp.zeros((CIN,), dtype=jnp.float32)
    conv_w = jax.random.normal(k_w, (COUT, CIN, 1, 1), dtype=jnp.float32) * 0.05

    out = bn_relu_conv1x1(x, gamma, beta, conv_w)
    out = jax.block_until_ready(out)

    ref = reference(x, gamma, beta, conv_w)
    assert out.shape == (N, COUT, H, W), out.shape
    assert out.dtype == jnp.float32, out.dtype
    # Tolerance reflects bf16 MXU operands with f32 accumulation.
    assert jnp.allclose(out, ref, atol=2e-2, rtol=2e-2), \
        float(jnp.max(jnp.abs(out - ref)))

    print("KERNEL_OK")
</pallas_src>

<mosaic_0001>
module attributes {stable_mosaic.version = 11 : i64} {
  func.func @bn_relu_conv1x1_kernel(%arg0: i32, %arg1: memref<256x196xf32, #tpu.memory_space<vmem>>, %arg2: memref<256x1xf32, #tpu.memory_space<vmem>>, %arg3: memref<256x1xf32, #tpu.memory_space<vmem>>, %arg4: memref<512x256xbf16, #tpu.memory_space<vmem>>, %arg5: memref<512x196xf32, #tpu.memory_space<vmem>>) attributes {dimension_semantics = [#tpu.dimension_semantics<parallel>], iteration_bounds = array<i64: 2>, scalar_prefetch = 0 : i64, scratch_operands = 0 : i64, tpu.core_type = #tpu.core_type<tc>, window_params = [{pipeline_mode = #tpu.pipeline_mode<synchronous>, transform_indices = @transform_0, window_bounds = array<i64: 256, 196>}, {pipeline_mode = #tpu.pipeline_mode<synchronous>, transform_indices = @transform_1, window_bounds = array<i64: 256, 1>}, {pipeline_mode = #tpu.pipeline_mode<synchronous>, transform_indices = @transform_2, window_bounds = array<i64: 256, 1>}, {transform_indices = @transform_3, window_bounds = array<i64: 512, 256>}, {transform_indices = @transform_4, window_bounds = array<i64: 512, 196>}]} {
    %c0 = arith.constant 0 : index
    %c0_0 = arith.constant 0 : index
    %0 = vector.load %arg1[%c0, %c0_0] : memref<256x196xf32, #tpu.memory_space<vmem>>, vector<256x196xf32>
    %cst = arith.constant dense<0.000000e+00> : vector<256xf32>
    %1 = vector.multi_reduction <add>, %0, %cst [1] : vector<256x196xf32> to vector<256xf32>
    %2 = vector.shape_cast %1 : vector<256xf32> to vector<256x1xf32>
    %3 = arith.mulf %0, %0 : vector<256x196xf32>
    %cst_1 = arith.constant dense<0.000000e+00> : vector<256xf32>
    %4 = vector.multi_reduction <add>, %3, %cst_1 [1] : vector<256x196xf32> to vector<256xf32>
    %5 = vector.shape_cast %4 : vector<256xf32> to vector<256x1xf32>
    %cst_2 = arith.constant 0.00510204071 : f32
    %6 = vector.broadcast %cst_2 : f32 to vector<256x1xf32>
    %7 = arith.mulf %2, %6 : vector<256x1xf32>
    %cst_3 = arith.constant 0.00510204071 : f32
    %8 = vector.broadcast %cst_3 : f32 to vector<256x1xf32>
    %9 = arith.mulf %5, %8 : vector<256x1xf32>
    %10 = arith.mulf %7, %7 : vector<256x1xf32>
    %11 = arith.subf %9, %10 : vector<256x1xf32>
    %c0_4 = arith.constant 0 : index
    %c0_5 = arith.constant 0 : index
    %12 = vector.load %arg2[%c0_4, %c0_5] : memref<256x1xf32, #tpu.memory_space<vmem>>, vector<256x1xf32>
    %cst_6 = arith.constant 9.99999974E-6 : f32
    %13 = vector.broadcast %cst_6 : f32 to vector<256x1xf32>
    %14 = arith.addf %11, %13 : vector<256x1xf32>
    %15 = math.rsqrt %14 : vector<256x1xf32>
    %16 = arith.mulf %12, %15 : vector<256x1xf32>
    %c0_7 = arith.constant 0 : index
    %c0_8 = arith.constant 0 : index
    %17 = vector.load %arg3[%c0_7, %c0_8] : memref<256x1xf32, #tpu.memory_space<vmem>>, vector<256x1xf32>
    %18 = arith.mulf %7, %16 : vector<256x1xf32>
    %19 = arith.subf %17, %18 : vector<256x1xf32>
    %20 = vector.broadcast %16 : vector<256x1xf32> to vector<256x196xf32>
    %21 = arith.mulf %0, %20 : vector<256x196xf32>
    %22 = vector.broadcast %19 : vector<256x1xf32> to vector<256x196xf32>
    %23 = arith.addf %21, %22 : vector<256x196xf32>
    %cst_9 = arith.constant 0.000000e+00 : f32
    %24 = vector.broadcast %cst_9 : f32 to vector<256x196xf32>
    %25 = arith.maximumf %23, %24 : vector<256x196xf32>
    %c0_10 = arith.constant 0 : index
    %c0_11 = arith.constant 0 : index
    %26 = vector.load %arg4[%c0_10, %c0_11] : memref<512x256xbf16, #tpu.memory_space<vmem>>, vector<512x256xbf16>
    %27 = arith.truncf %25 : vector<256x196xf32> to vector<256x196xbf16>
    %cst_12 = arith.constant dense<0.000000e+00> : vector<512x196xf32>
    %28 = tpu.matmul %26, %27, %cst_12 {dimension_numbers = #tpu.dot_dimension_numbers<[1], [0], [0], [1], [0, 0, 1, 1], [], []>} : vector<512x256xbf16>, vector<256x196xbf16>, vector<512x196xf32> -> vector<512x196xf32>
    %c0_13 = arith.constant 0 : index
    %c0_14 = arith.constant 0 : index
    %29 = vector.load %arg5[%c0_13, %c0_14] : memref<512x196xf32, #tpu.memory_space<vmem>>, vector<512x196xf32>
    tpu.vector_store %arg5[%c0_13, %c0_14], %28 {strides = array<i32>} : memref<512x196xf32, #tpu.memory_space<vmem>>, vector<512x196xf32>,
    return
  }
  func.func @transform_0(%arg0: i32) -> (i32, i32) {
    %c0_i32 = arith.constant 0 : i32
    %c0_i32_0 = arith.constant 0 : i32
    %c0_i32_1 = arith.constant 0 : i32
    return %c0_i32, %c0_i32_0 : i32, i32
  }
  func.func @transform_1(%arg0: i32) -> (i32, i32) {
    %c0_i32 = arith.constant 0 : i32
    %c0_i32_0 = arith.constant 0 : i32
    %c0_i32_1 = arith.constant 0 : i32
    return %c0_i32, %c0_i32_0 : i32, i32
  }
  func.func @transform_2(%arg0: i32) -> (i32, i32) {
    %c0_i32 = arith.constant 0 : i32
    %c0_i32_0 = arith.constant 0 : i32
    %c0_i32_1 = arith.constant 0 : i32
    return %c0_i32, %c0_i32_0 : i32, i32
  }
  func.func @transform_3(%arg0: i32) -> (i32, i32) {
    %c0_i32 = arith.constant 0 : i32
    %c0_i32_0 = arith.constant 0 : i32
    return %arg0, %c0_i32 : i32, i32
  }
  func.func @transform_4(%arg0: i32) -> (i32, i32) {
    %c0_i32 = arith.constant 0 : i32
    %c0_i32_0 = arith.constant 0 : i32
    return %arg0, %c0_i32 : i32, i32
  }
}

</mosaic_0001>

<llo_original>
// kernel: bn_relu_conv1x1.1
$region0: #{bn_relu_conv1x1.1}
  #allocation0 [shape = 'u32[]', space=smem, size = 0x4, offset = 0x4, fixed_abs, tag = 'smem constant byte address 0x4 - core index']
  #allocation1 [shape = 'u32[144,128]{1,0:T(1,128)}', space=vmem, size = 0x12000, scoped, tag = 'internal scratch']
  %s0 = inlined_call_operand.vmem [shape: f32[256,196], index: 0, kind: input, shape index: {}]
  %s1 = inlined_call_operand.vmem [shape: f32[256,1], index: 1, kind: input, shape index: {}]
  %s2 = inlined_call_operand.vmem [shape: f32[256,1], index: 2, kind: input, shape index: {}]
  %s3 = inlined_call_operand.vmem [shape: bf16[1024,256], index: 3, kind: input, shape index: {}]
  %s4 = inlined_call_operand.vmem [shape: f32[1024,196], index: 4, kind: output, shape index: {}]
  %s5 = sld [smem:[#allocation0]]
  $region49: #{bn_relu_conv1x1.1} parent=0
    _
  %s7 = ssub.s32 1, %s5
  %s8 = scalar_select 0, %s7, %s5
  loop: start=0, step=1, limit=4
  $region2: #{bn_relu_conv1x1.1} parent=0 // loop_pre_header
    _
  $region3: #{bn_relu_conv1x1.1} parent=0 // loop_header
    %s10 = sphi 0, %s14
    %p11 = scmp.ge.s32.totalorder %s10, 4
    %s18 = sphi 0, %s18
    %s20 = sphi 0, %s18
    %s21 = sphi 0, %s20
    %s35 = sphi 0, %s21
    %s39 = sphi 0, %s39
    %s41 = sphi 0, %s39
    %s42 = sphi 0, %s41
    %s56 = sphi 0, %s42
    %s60 = sphi 0, %s60
    %s62 = sphi 0, %s60
    %s63 = sphi 0, %s62
    %s77 = sphi 0, %s63
    %s83 = sphi 0, %s85
    %s86 = sphi 0, %s83
    %s87 = sphi 0, %s86
    %s103 = sphi 0, %s87
    %s109 = sphi 0, %s111
    %s112 = sphi 0, %s109
    %s113 = sphi 0, %s112
    %s129 = sphi 0, %s113
  $region4: #{bn_relu_conv1x1.1} parent=0 // loop_header_branch
    %13 = sbr.rel (%p11) target = $region8
  $region5: #{bn_relu_conv1x1.1} parent=0 // loop_body
    %s15 = ssub.s32 %s10, 1
    %s16 = ssub.s32 %s10, 2
    %s17 = sadd.s32 %s10, 1
    %s19 = sadd.s32 %s18, 1
    %p22 = scmp.eq.s32.totalorder %s10, 1
    %p23 = scmp.ne.s32.totalorder %s18, %s20
    %p24 = scmp.eq.s32.totalorder %s10, 0
    %p25 = por %p23, %p24
    %p26 = scmp.ne.s32.totalorder %s18, %s20
    %p27 = scmp.eq.s32.totalorder %s15, 1
    %p28 = por %p26, %p27
    %p29 = scmp.ne.s32.totalorder %s20, %s21
    %p30 = scmp.eq.s32.totalorder %s15, 0
    %p31 = por %p29, %p30
    %p32 = scmp.ne.s32.totalorder %s20, %s21
    %p33 = scmp.eq.s32.totalorder %s16, 1
    %p34 = por %p32, %p33
    %p36 = scmp.ne.s32.totalorder %s21, %s35
    %p37 = scmp.eq.s32.totalorder %s16, 0
    %p38 = por %p36, %p37
    %s40 = sadd.s32 %s39, 1
    %p43 = scmp.eq.s32.totalorder %s10, 1
    %p44 = scmp.ne.s32.totalorder %s39, %s41
    %p45 = scmp.eq.s32.totalorder %s10, 0
    %p46 = por %p44, %p45
    %p47 = scmp.ne.s32.totalorder %s39, %s41
    %p48 = scmp.eq.s32.totalorder %s15, 1
    %p49 = por %p47, %p48
    %p50 = scmp.ne.s32.totalorder %s41, %s42
    %p51 = scmp.eq.s32.totalorder %s15, 0
    %p52 = por %p50, %p51
    %p53 = scmp.ne.s32.totalorder %s41, %s42
    %p54 = scmp.eq.s32.totalorder %s16, 1
    %p55 = por %p53, %p54
    %p57 = scmp.ne.s32.totalorder %s42, %s56
    %p58 = scmp.eq.s32.totalorder %s16, 0
    %p59 = por %p57, %p58
    %s61 = sadd.s32 %s60, 1
    %p64 = scmp.eq.s32.totalorder %s10, 1
    %p65 = scmp.ne.s32.totalorder %s60, %s62
    %p66 = scmp.eq.s32.totalorder %s10, 0
    %p67 = por %p65, %p66
    %p68 = scmp.ne.s32.totalorder %s60, %s62
    %p69 = scmp.eq.s32.totalorder %s15, 1
    %p70 = por %p68, %p69
    %p71 = scmp.ne.s32.totalorder %s62, %s63
    %p72 = scmp.eq.s32.totalorder %s15, 0
    %p73 = por %p71, %p72
    %p74 = scmp.ne.s32.totalorder %s62, %s63
    %p75 = scmp.eq.s32.totalorder %s16, 1
    %p76 = por %p74, %p75
    %p78 = scmp.ne.s32.totalorder %s63, %s77
    %p79 = scmp.eq.s32.totalorder %s16, 0
    %p80 = por %p78, %p79
    %s81 = ssub.s32 %s10, %s17
    %p82 = scmp.eq.s32.totalorder %s81, 0
    %s84 = sadd.s32 %s83, 1
    %s85 = scalar_select %p82, %s83, %s84
    %p88 = pneg %p82
    %p89 = scmp.eq.s32.totalorder %s10, 1
    %p90 = por %p88, %p89
    %p91 = scmp.ne.s32.totalorder %s83, %s86
    %p92 = scmp.eq.s32.totalorder %s10, 0
    %p93 = por %p91, %p92
    %p94 = scmp.ne.s32.totalorder %s83, %s86
    %p95 = scmp.eq.s32.totalorder %s15, 1
    %p96 = por %p94, %p95
    %p97 = scmp.ne.s32.totalorder %s86, %s87
    %p98 = scmp.eq.s32.totalorder %s15, 0
    %p99 = por %p97, %p98
    %p100 = scmp.ne.s32.totalorder %s86, %s87
    %p101 = scmp.eq.s32.totalorder %s16, 1
    %p102 = por %p100, %p101
    %p104 = scmp.ne.s32.totalorder %s87, %s103
    %p105 = scmp.eq.s32.totalorder %s16, 0
    %p106 = por %p104, %p105
    %s107 = ssub.s32 %s10, %s17
    %p108 = scmp.eq.s32.totalorder %s107, 0
    %s110 = sadd.s32 %s109, 1
    %s111 = scalar_select %p108, %s109, %s110
    %p114 = pneg %p108
    %p115 = scmp.eq.s32.totalorder %s10, 1
    %p116 = por %p114, %p115
    %p117 = scmp.ne.s32.totalorder %s109, %s112
    %p118 = scmp.eq.s32.totalorder %s10, 0
    %p119 = por %p117, %p118
    %p120 = scmp.ne.s32.totalorder %s109, %s112
    %p121 = scmp.eq.s32.totalorder %s15, 1
    %p122 = por %p120, %p121
    %p123 = scmp.ne.s32.totalorder %s112, %s113
    %p124 = scmp.eq.s32.totalorder %s15, 0
    %p125 = por %p123, %p124
    %p126 = scmp.ne.s32.totalorder %s112, %s113
    %p127 = scmp.eq.s32.totalorder %s16, 1
    %p128 = por %p126, %p127
    %p130 = scmp.ne.s32.totalorder %s113, %s129
    %p131 = scmp.eq.s32.totalorder %s16, 0
    %p132 = por %p130, %p131
    %p133 = scmp.le.s32.totalorder 1, %s10
    %p134 = scmp.lt.s32.totalorder %s10, 3
    %p135 = pnand %p133, %p134
    %p136 = pneg %p135
    // Predicated region
    $region9: #{bn_relu_conv1x1.1} parent=5 // pred_check
      _
    $region10: #{bn_relu_conv1x1.1} parent=5 // pred_check_branch
      %138 = sbr.rel (%p135) target = $region12
    $region11: #{bn_relu_conv1x1.1} parent=5 // pred_region
      %s139 = ssub.s32 %s10, 1
      // Predicated region
      $region13: #{bn_relu_conv1x1.1} parent=11 // pred_check
        %p140 = pneg %p31
      $region14: #{bn_relu_conv1x1.1} parent=11 // pred_check_branch
        %142 = sbr.rel (%p140) target = $region16
      $region15: #{bn_relu_conv1x1.1} parent=11 // pred_region
        _
      $region16: #{bn_relu_conv1x1.1} parent=11 // pred_fallthru
        _
      // Predicated region
      $region17: #{bn_relu_conv1x1.1} parent=11 // pred_check
        %p143 = pneg %p52
      $region18: #{bn_relu_conv1x1.1} parent=11 // pred_check_branch
        %145 = sbr.rel (%p143) target = $region20
      $region19: #{bn_relu_conv1x1.1} parent=11 // pred_region
        _
      $region20: #{bn_relu_conv1x1.1} parent=11 // pred_fallthru
        _
      // Predicated region
      $region21: #{bn_relu_conv1x1.1} parent=11 // pred_check
        %p146 = pneg %p73
      $region22: #{bn_relu_conv1x1.1} parent=11 // pred_check_branch
        %148 = sbr.rel (%p146) target = $region24
      $region23: #{bn_relu_conv1x1.1} parent=11 // pred_region
        _
      $region24: #{bn_relu_conv1x1.1} parent=11 // pred_fallthru
        _
    $region12: #{bn_relu_conv1x1.1} parent=5 // pred_fallthru
      _
    %p149 = scmp.lt.s32.totalorder %s10, 2
    // Predicated region
    $region25: #{bn_relu_conv1x1.1} parent=5 // pred_check
      %p150 = pneg %p149
    $region26: #{bn_relu_conv1x1.1} parent=5 // pred_check_branch
      %152 = sbr.rel (%p150) target = $region28
    $region27: #{bn_relu_conv1x1.1} parent=5 // pred_region
      // Predicated region
      $region29: #{bn_relu_conv1x1.1} parent=27 // pred_check
        %p153 = pneg %p93
      $region30: #{bn_relu_conv1x1.1} parent=27 // pred_check_branch
        %155 = sbr.rel (%p153) target = $region32
      $region31: #{bn_relu_conv1x1.1} parent=27 // pred_region
        %s156 = smul.u32 64, %s10
        %p157 = scmp.lt.s32.totalorder %s156, 127
        %s158 = scalar_select %p157, %s156, 127
        %s159 = smul.addr %s158, 2
        %s160 = smul.addr %s159, 4
        %s161 = scalar_lea.vmem %s3, %s160
        %s162 = smul.u32 64, %s10
      $region32: #{bn_relu_conv1x1.1} parent=27 // pred_fallthru
        _
    $region28: #{bn_relu_conv1x1.1} parent=5 // pred_fallthru
      _
    %p163 = scmp.le.s32.totalorder 1, %s10
    %p164 = scmp.lt.s32.totalorder %s10, 3
    %p165 = pnand %p163, %p164
    %p166 = pneg %p165
    // Predicated region
    $region33: #{bn_relu_conv1x1.1} parent=5 // pred_check
      _
    $region34: #{bn_relu_conv1x1.1} parent=5 // pred_check_branch
      %168 = sbr.rel (%p165) target = $region36
    $region35: #{bn_relu_conv1x1.1} parent=5 // pred_region
      %s169 = ssub.s32 %s10, 1
      %p170 = pneg %p31
      %p171 = pneg %p28
      %p172 = pneg %p52
      %p173 = pneg %p49
      %p174 = pneg %p73
      %p175 = pneg %p70
      %s176 = smul.u32 64, %s15
      %p177 = scmp.lt.s32.totalorder %s176, 127
      %s178 = scalar_select %p177, %s176, 127
      %s179 = smul.addr %s178, 2
      %s180 = smul.addr %s179, 4
      %s181 = scalar_lea.vmem %s3, %s180
      %p182 = pneg %p99
      %p183 = pneg %p96
      %p184 = pneg %p125
      %p185 = pneg %p122
      %s186 = smul.u32 64, %s15
      %p187 = scmp.lt.s32.totalorder %s186, 127
      %s188 = scalar_select %p187, %s186, 127
      %s189 = smul.addr %s188, 2
      %s190 = smul.addr %s189, 8
      %s191 = scalar_lea.vmem %s4, %s190
      %s192 = smul.u32 64, %s15
      %p193 = scmp.lt.s32.totalorder %s192, 127
      %s194 = scalar_select %p193, %s192, 127
      %s195 = smul.addr %s194, 2
      %s196 = smul.addr %s195, 4
      %s197 = scalar_lea.vmem %s3, %s196
      %s198 = smul.u32 64, %s15
      %s199 = smul.u32 64, %s15
      %p200 = scmp.lt.s32.totalorder %s199, 127
      %s201 = scalar_select %p200, %s199, 127
      %s202 = smul.addr %s201, 2
      %s203 = smul.addr %s202, 8
      %s204 = scalar_lea.vmem %s4, %s203
      %s205 = smul.u32 64, %s15
      %v206 = vld [vmem:[%s0] sm:$0xff]
      %v207 = vld [vmem:[%s0 + $0x8] sm:$0xff]
      %v208 = vld [vmem:[%s0 + $0x10] sm:$0xff]
      %v209 = vld [vmem:[%s0 + $0x18] sm:$0xff]
      %v210 = vld [vmem:[%s0 + $0x20] sm:$0xff]
      %v211 = vld [vmem:[%s0 + $0x28] sm:$0xff]
      %v212 = vld [vmem:[%s0 + $0x30] sm:$0xff]
      %v213 = vld [vmem:[%s0 + $0x38] sm:$0xff]
      %v214 = vld [vmem:[%s0 + $0x40] sm:$0xff]
      %v215 = vld [vmem:[%s0 + $0x48] sm:$0xff]
      %v216 = vld [vmem:[%s0 + $0x50] sm:$0xff]
      %v217 = vld [vmem:[%s0 + $0x58] sm:$0xff]
      %v218 = vld [vmem:[%s0 + $0x60] sm:$0xff]
      %v219 = vld [vmem:[%s0 + $0x68] sm:$0xff]
      %v220 = vld [vmem:[%s0 + $0x70] sm:$0xff]
      %v221 = vld [vmem:[%s0 + $0x78] sm:$0xff]
      %v222 = vld [vmem:[%s0 + $0x80] sm:$0xff]
      %v223 = vld [vmem:[%s0 + $0x88] sm:$0xff]
      %v224 = vld [vmem:[%s0 + $0x90] sm:$0xff]
      %v225 = vld [vmem:[%s0 + $0x98] sm:$0xff]
      %v226 = vld [vmem:[%s0 + $0xa0] sm:$0xff]
      %v227 = vld [vmem:[%s0 + $0xa8] sm:$0xff]
      %v228 = vld [vmem:[%s0 + $0xb0] sm:$0xff]
      %v229 = vld [vmem:[%s0 + $0xb8] sm:$0xff]
      %v230 = vld [vmem:[%s0 + $0xc0] sm:$0xff]
      %v231 = vld [vmem:[%s0 + $0xc8] sm:$0xff]
      %v232 = vld [vmem:[%s0 + $0xd0] sm:$0xff]
      %v233 = vld [vmem:[%s0 + $0xd8] sm:$0xff]
      %v234 = vld [vmem:[%s0 + $0xe0] sm:$0xff]
      %v235 = vld [vmem:[%s0 + $0xe8] sm:$0xff]
      %v236 = vld [vmem:[%s0 + $0xf0] sm:$0xff]
      %v237 = vld [vmem:[%s0 + $0xf8] sm:$0xff]
      %v238 = vld [vmem:[%s0 + $0x100] sm:$0xff]
      %v239 = vld [vmem:[%s0 + $0x108] sm:$0xff]
      %v240 = vld [vmem:[%s0 + $0x110] sm:$0xff]
      %v241 = vld [vmem:[%s0 + $0x118] sm:$0xff]
      %v242 = vld [vmem:[%s0 + $0x120] sm:$0xff]
      %v243 = vld [vmem:[%s0 + $0x128] sm:$0xff]
      %v244 = vld [vmem:[%s0 + $0x130] sm:$0xff]
      %v245 = vld [vmem:[%s0 + $0x138] sm:$0xff]
      %v246 = vld [vmem:[%s0 + $0x140] sm:$0xff]
      %v247 = vld [vmem:[%s0 + $0x148] sm:$0xff]
      %v248 = vld [vmem:[%s0 + $0x150] sm:$0xff]
      %v249 = vld [vmem:[%s0 + $0x158] sm:$0xff]
      %v250 = vld [vmem:[%s0 + $0x160] sm:$0xff]
      %v251 = vld [vmem:[%s0 + $0x168] sm:$0xff]
      %v252 = vld [vmem:[%s0 + $0x170] sm:$0xff]
      %v253 = vld [vmem:[%s0 + $0x178] sm:$0xff]
      %v254 = vld [vmem:[%s0 + $0x180] sm:$0xff]
      %v255 = vld [vmem:[%s0 + $0x188] sm:$0xff]
      %v256 = vld [vmem:[%s0 + $0x190] sm:$0xff]
      %v257 = vld [vmem:[%s0 + $0x198] sm:$0xff]
      %v258 = vld [vmem:[%s0 + $0x1a0] sm:$0xff]
      %v259 = vld [vmem:[%s0 + $0x1a8] sm:$0xff]
      %v260 = vld [vmem:[%s0 + $0x1b0] sm:$0xff]
      %v261 = vld [vmem:[%s0 + $0x1b8] sm:$0xff]
      %v262 = vld [vmem:[%s0 + $0x1c0] sm:$0xff]
      %v263 = vld [vmem:[%s0 + $0x1c8] sm:$0xff]
      %v264 = vld [vmem:[%s0 + $0x1d0] sm:$0xff]
      %v265 = vld [vmem:[%s0 + $0x1d8] sm:$0xff]
      %v266 = vld [vmem:[%s0 + $0x1e0] sm:$0xff]
      %v267 = vld [vmem:[%s0 + $0x1e8] sm:$0xff]
      %v268 = vld [vmem:[%s0 + $0x1f0] sm:$0xff]
      %v269 = vld [vmem:[%s0 + $0x1f8] sm:$0xff]
      %vm270 = vcmask 556032
      %v271 = vsel %vm270, %v207, 0.0
      %v272 = vadd.f32 %v206, %v271
      %273 = vadd.xlane.f32.xlu0 %v272
      %v274 = vpop.xlane.xlu0 %273
      %v275 = vsel %vm270, %v209, 0.0
      %v276 = vadd.f32 %v208, %v275
      %277 = vadd.xlane.f32.xlu0 %v276
      %v278 = vpop.xlane.xlu0 %277
      %v279 = vsel %vm270, %v211, 0.0
      %v280 = vadd.f32 %v210, %v279
      %281 = vadd.xlane.f32.xlu0 %v280
      %v282 = vpop.xlane.xlu0 %281
      %v283 = vsel %vm270, %v213, 0.0
      %v284 = vadd.f32 %v212, %v283
      %285 = vadd.xlane.f32.xlu0 %v284
      %v286 = vpop.xlane.xlu0 %285
      %v287 = vsel %vm270, %v215, 0.0
      %v288 = vadd.f32 %v214, %v287
      %289 = vadd.xlane.f32.xlu0 %v288
      %v290 = vpop.xlane.xlu0 %289
      %v291 = vsel %vm270, %v217, 0.0
      %v292 = vadd.f32 %v216, %v291
      %293 = vadd.xlane.f32.xlu0 %v292
      %v294 = vpop.xlane.xlu0 %293
      %v295 = vsel %vm270, %v219, 0.0
      %v296 = vadd.f32 %v218, %v295
      %297 = vadd.xlane.f32.xlu0 %v296
      %v298 = vpop.xlane.xlu0 %297
      %v299 = vsel %vm270, %v221, 0.0
      %v300 = vadd.f32 %v220, %v299
      %301 = vadd.xlane.f32.xlu0 %v300
      %v302 = vpop.xlane.xlu0 %301
      %v303 = vsel %vm270, %v223, 0.0
      %v304 = vadd.f32 %v222, %v303
      %305 = vadd.xlane.f32.xlu0 %v304
      %v306 = vpop.xlane.xlu0 %305
      %v307 = vsel %vm270, %v225, 0.0
      %v308 = vadd.f32 %v224, %v307
      %309 = vadd.xlane.f32.xlu0 %v308
      %v310 = vpop.xlane.xlu0 %309
      %v311 = vsel %vm270, %v227, 0.0
      %v312 = vadd.f32 %v226, %v311
      %313 = vadd.xlane.f32.xlu0 %v312
      %v314 = vpop.xlane.xlu0 %313
      %v315 = vsel %vm270, %v229, 0.0
      %v316 = vadd.f32 %v228, %v315
      %317 = vadd.xlane.f32.xlu0 %v316
      %v318 = vpop.xlane.xlu0 %317
      %v319 = vsel %vm270, %v231, 0.0
      %v320 = vadd.f32 %v230, %v319
      %321 = vadd.xlane.f32.xlu0 %v320
      %v322 = vpop.xlane.xlu0 %321
      %v323 = vsel %vm270, %v233, 0.0
      %v324 = vadd.f32 %v232, %v323
      %325 = vadd.xlane.f32.xlu0 %v324
      %v326 = vpop.xlane.xlu0 %325
      %v327 = vsel %vm270, %v235, 0.0
      %v328 = vadd.f32 %v234, %v327
      %329 = vadd.xlane.f32.xlu0 %v328
      %v330 = vpop.xlane.xlu0 %329
      %v331 = vsel %vm270, %v237, 0.0
      %v332 = vadd.f32 %v236, %v331
      %333 = vadd.xlane.f32.xlu0 %v332
      %v334 = vpop.xlane.xlu0 %333
      %v335 = vsel %vm270, %v239, 0.0
      %v336 = vadd.f32 %v238, %v335
      %337 = vadd.xlane.f32.xlu0 %v336
      %v338 = vpop.xlane.xlu0 %337
      %v339 = vsel %vm270, %v241, 0.0
      %v340 = vadd.f32 %v240, %v339
      %341 = vadd.xlane.f32.xlu0 %v340
      %v342 = vpop.xlane.xlu0 %341
      %v343 = vsel %vm270, %v243, 0.0
      %v344 = vadd.f32 %v242, %v343
      %345 = vadd.xlane.f32.xlu0 %v344
      %v346 = vpop.xlane.xlu0 %345
      %v347 = vsel %vm270, %v245, 0.0
      %v348 = vadd.f32 %v244, %v347
      %349 = vadd.xlane.f32.xlu0 %v348
      %v350 = vpop.xlane.xlu0 %349
      %v351 = vsel %vm270, %v247, 0.0
      %v352 = vadd.f32 %v246, %v351
      %353 = vadd.xlane.f32.xlu0 %v352
      %v354 = vpop.xlane.xlu0 %353
      %v355 = vsel %vm270, %v249, 0.0
      %v356 = vadd.f32 %v248, %v355
      %357 = vadd.xlane.f32.xlu0 %v356
      %v358 = vpop.xlane.xlu0 %357
      %v359 = vsel %vm270, %v251, 0.0
      %v360 = vadd.f32 %v250, %v359
      %361 = vadd.xlane.f32.xlu0 %v360
      %v362 = vpop.xlane.xlu0 %361
      %v363 = vsel %vm270, %v253, 0.0
      %v364 = vadd.f32 %v252, %v363
      %365 = vadd.xlane.f32.xlu0 %v364
      %v366 = vpop.xlane.xlu0 %365
      %v367 = vsel %vm270, %v255, 0.0
      %v368 = vadd.f32 %v254, %v367
      %369 = vadd.xlane.f32.xlu0 %v368
      %v370 = vpop.xlane.xlu0 %369
      %v371 = vsel %vm270, %v257, 0.0
      %v372 = vadd.f32 %v256, %v371
      %373 = vadd.xlane.f32.xlu0 %v372
      %v374 = vpop.xlane.xlu0 %373
      %v375 = vsel %vm270, %v259, 0.0
      %v376 = vadd.f32 %v258, %v375
      %377 = vadd.xlane.f32.xlu0 %v376
      %v378 = vpop.xlane.xlu0 %377
      %v379 = vsel %vm270, %v261, 0.0
      %v380 = vadd.f32 %v260, %v379
      %381 = vadd.xlane.f32.xlu0 %v380
      %v382 = vpop.xlane.xlu0 %381
      %v383 = vsel %vm270, %v263, 0.0
      %v384 = vadd.f32 %v262, %v383
      %385 = vadd.xlane.f32.xlu0 %v384
      %v386 = vpop.xlane.xlu0 %385
      %v387 = vsel %vm270, %v265, 0.0
      %v388 = vadd.f32 %v264, %v387
      %389 = vadd.xlane.f32.xlu0 %v388
      %v390 = vpop.xlane.xlu0 %389
      %v391 = vsel %vm270, %v267, 0.0
      %v392 = vadd.f32 %v266, %v391
      %393 = vadd.xlane.f32.xlu0 %v392
      %v394 = vpop.xlane.xlu0 %393
      %v395 = vsel %vm270, %v269, 0.0
      %v396 = vadd.f32 %v268, %v395
      %397 = vadd.xlane.f32.xlu0 %v396
      %v398 = vpop.xlane.xlu0 %397
      %v399 = vmul.f32 %v206, %v206
      %v400 = vmul.f32 %v207, %v207
      %v401 = vmul.f32 %v208, %v208
      %v402 = vmul.f32 %v209, %v209
      %v403 = vmul.f32 %v210, %v210
      %v404 = vmul.f32 %v211, %v211
      %v405 = vmul.f32 %v212, %v212
      %v406 = vmul.f32 %v213, %v213
      %v407 = vmul.f32 %v214, %v214
      %v408 = vmul.f32 %v215, %v215
      %v409 = vmul.f32 %v216, %v216
      %v410 = vmul.f32 %v217, %v217
      %v411 = vmul.f32 %v218, %v218
      %v412 = vmul.f32 %v219, %v219
      %v413 = vmul.f32 %v220, %v220
      %v414 = vmul.f32 %v221, %v221
      %v415 = vmul.f32 %v222, %v222
      %v416 = vmul.f32 %v223, %v223
      %v417 = vmul.f32 %v224, %v224
      %v418 = vmul.f32 %v225, %v225
      %v419 = vmul.f32 %v226, %v226
      %v420 = vmul.f32 %v227, %v227
      %v421 = vmul.f32 %v228, %v228
      %v422 = vmul.f32 %v229, %v229
      %v423 = vmul.f32 %v230, %v230
      %v424 = vmul.f32 %v231, %v231
      %v425 = vmul.f32 %v232, %v232
      %v426 = vmul.f32 %v233, %v233
      %v427 = vmul.f32 %v234, %v234
      %v428 = vmul.f32 %v235, %v235
      %v429 = vmul.f32 %v236, %v236
      %v430 = vmul.f32 %v237, %v237
      %v431 = vmul.f32 %v238, %v238
      %v432 = vmul.f32 %v239, %v239
      %v433 = vmul.f32 %v240, %v240
      %v434 = vmul.f32 %v241, %v241
      %v435 = vmul.f32 %v242, %v242
      %v436 = vmul.f32 %v243, %v243
      %v437 = vmul.f32 %v244, %v244
      %v438 = vmul.f32 %v245, %v245
      %v439 = vmul.f32 %v246, %v246
      %v440 = vmul.f32 %v247, %v247
      %v441 = vmul.f32 %v248, %v248
      %v442 = vmul.f32 %v249, %v249
      %v443 = vmul.f32 %v250, %v250
      %v444 = vmul.f32 %v251, %v251
      %v445 = vmul.f32 %v252, %v252
      %v446 = vmul.f32 %v253, %v253
      %v447 = vmul.f32 %v254, %v254
      %v448 = vmul.f32 %v255, %v255
      %v449 = vmul.f32 %v256, %v256
      %v450 = vmul.f32 %v257, %v257
      %v451 = vmul.f32 %v258, %v258
      %v452 = vmul.f32 %v259, %v259
      %v453 = vmul.f32 %v260, %v260
      %v454 = vmul.f32 %v261, %v261
      %v455 = vmul.f32 %v262, %v262
      %v456 = vmul.f32 %v263, %v263
      %v457 = vmul.f32 %v264, %v264
      %v458 = vmul.f32 %v265, %v265
      %v459 = vmul.f32 %v266, %v266
      %v460 = vmul.f32 %v267, %v267
      %v461 = vmul.f32 %v268, %v268
      %v462 = vmul.f32 %v269, %v269
      %v463 = vsel %vm270, %v400, 0.0
      %v464 = vadd.f32 %v399, %v463
      %465 = vadd.xlane.f32.xlu0 %v464
      %v466 = vpop.xlane.xlu0 %465
      %v467 = vsel %vm270, %v402, 0.0
      %v468 = vadd.f32 %v401, %v467
      %469 = vadd.xlane.f32.xlu0 %v468
      %v470 = vpop.xlane.xlu0 %469
      %v471 = vsel %vm270, %v404, 0.0
      %v472 = vadd.f32 %v403, %v471
      %473 = vadd.xlane.f32.xlu0 %v472
      %v474 = vpop.xlane.xlu0 %473
      %v475 = vsel %vm270, %v406, 0.0
      %v476 = vadd.f32 %v405, %v475
      %477 = vadd.xlane.f32.xlu0 %v476
      %v478 = vpop.xlane.xlu0 %477
      %v479 = vsel %vm270, %v408, 0.0
      %v480 = vadd.f32 %v407, %v479
      %481 = vadd.xlane.f32.xlu0 %v480
      %v482 = vpop.xlane.xlu0 %481
      %v483 = vsel %vm270, %v410, 0.0
      %v484 = vadd.f32 %v409, %v483
      %485 = vadd.xlane.f32.xlu0 %v484
      %v486 = vpop.xlane.xlu0 %485
      %v487 = vsel %vm270, %v412, 0.0
      %v488 = vadd.f32 %v411, %v487
      %489 = vadd.xlane.f32.xlu0 %v488
      %v490 = vpop.xlane.xlu0 %489
      %v491 = vsel %vm270, %v414, 0.0
      %v492 = vadd.f32 %v413, %v491
      %493 = vadd.xlane.f32.xlu0 %v492
      %v494 = vpop.xlane.xlu0 %493
      %v495 = vsel %vm270, %v416, 0.0
      %v496 = vadd.f32 %v415, %v495
      %497 = vadd.xlane.f32.xlu0 %v496
      %v498 = vpop.xlane.xlu0 %497
      %v499 = vsel %vm270, %v418, 0.0
      %v500 = vadd.f32 %v417, %v499
      %501 = vadd.xlane.f32.xlu0 %v500
      %v502 = vpop.xlane.xlu0 %501
      %v503 = vsel %vm270, %v420, 0.0
      %v504 = vadd.f32 %v419, %v503
      %505 = vadd.xlane.f32.xlu0 %v504
      %v506 = vpop.xlane.xlu0 %505
      %v507 = vsel %vm270, %v422, 0.0
      %v508 = vadd.f32 %v421, %v507
      %509 = vadd.xlane.f32.xlu0 %v508
      %v510 = vpop.xlane.xlu0 %509
      %v511 = vsel %vm270, %v424, 0.0
      %v512 = vadd.f32 %v423, %v511
      %513 = vadd.xlane.f32.xlu0 %v512
      %v514 = vpop.xlane.xlu0 %513
      %v515 = vsel %vm270, %v426, 0.0
      %v516 = vadd.f32 %v425, %v515
      %517 = vadd.xlane.f32.xlu0 %v516
      %v518 = vpop.xlane.xlu0 %517
      %v519 = vsel %vm270, %v428, 0.0
      %v520 = vadd.f32 %v427, %v519
      %521 = vadd.xlane.f32.xlu0 %v520
      %v522 = vpop.xlane.xlu0 %521
      %v523 = vsel %vm270, %v430, 0.0
      %v524 = vadd.f32 %v429, %v523
      %525 = vadd.xlane.f32.xlu0 %v524
      %v526 = vpop.xlane.xlu0 %525
      %v527 = vsel %vm270, %v432, 0.0
      %v528 = vadd.f32 %v431, %v527
      %529 = vadd.xlane.f32.xlu0 %v528
      %v530 = vpop.xlane.xlu0 %529
      %v531 = vsel %vm270, %v434, 0.0
      %v532 = vadd.f32 %v433, %v531
      %533 = vadd.xlane.f32.xlu0 %v532
      %v534 = vpop.xlane.xlu0 %533
      %v535 = vsel %vm270, %v436, 0.0
      %v536 = vadd.f32 %v435, %v535
      %537 = vadd.xlane.f32.xlu0 %v536
      %v538 = vpop.xlane.xlu0 %537
      %v539 = vsel %vm270, %v438, 0.0
      %v540 = vadd.f32 %v437, %v539
      %541 = vadd.xlane.f32.xlu0 %v540
      %v542 = vpop.xlane.xlu0 %541
      %v543 = vsel %vm270, %v440, 0.0
      %v544 = vadd.f32 %v439, %v543
      %545 = vadd.xlane.f32.xlu0 %v544
      %v546 = vpop.xlane.xlu0 %545
      %v547 = vsel %vm270, %v442, 0.0
      %v548 = vadd.f32 %v441, %v547
      %549 = vadd.xlane.f32.xlu0 %v548
      %v550 = vpop.xlane.xlu0 %549
      %v551 = vsel %vm270, %v444, 0.0
      %v552 = vadd.f32 %v443, %v551
      %553 = vadd.xlane.f32.xlu0 %v552
      %v554 = vpop.xlane.xlu0 %553
      %v555 = vsel %vm270, %v446, 0.0
      %v556 = vadd.f32 %v445, %v555
      %557 = vadd.xlane.f32.xlu0 %v556
      %v558 = vpop.xlane.xlu0 %557
      %v559 = vsel %vm270, %v448, 0.0
      %v560 = vadd.f32 %v447, %v559
      %561 = vadd.xlane.f32.xlu0 %v560
      %v562 = vpop.xlane.xlu0 %561
      %v563 = vsel %vm270, %v450, 0.0
      %v564 = vadd.f32 %v449, %v563
      %565 = vadd.xlane.f32.xlu0 %v564
      %v566 = vpop.xlane.xlu0 %565
      %v567 = vsel %vm270, %v452, 0.0
      %v568 = vadd.f32 %v451, %v567
      %569 = vadd.xlane.f32.xlu0 %v568
      %v570 = vpop.xlane.xlu0 %569
      %v571 = vsel %vm270, %v454, 0.0
      %v572 = vadd.f32 %v453, %v571
      %573 = vadd.xlane.f32.xlu0 %v572
      %v574 = vpop.xlane.xlu0 %573
      %v575 = vsel %vm270, %v456, 0.0
      %v576 = vadd.f32 %v455, %v575
      %577 = vadd.xlane.f32.xlu0 %v576
      %v578 = vpop.xlane.xlu0 %577
      %v579 = vsel %vm270, %v458, 0.0
      %v580 = vadd.f32 %v457, %v579
      %581 = vadd.xlane.f32.xlu0 %v580
      %v582 = vpop.xlane.xlu0 %581
      %v583 = vsel %vm270, %v460, 0.0
      %v584 = vadd.f32 %v459, %v583
      %585 = vadd.xlane.f32.xlu0 %v584
      %v586 = vpop.xlane.xlu0 %585
      %v587 = vsel %vm270, %v462, 0.0
      %v588 = vadd.f32 %v461, %v587
      %589 = vadd.xlane.f32.xlu0 %v588
      %v590 = vpop.xlane.xlu0 %589
      %v591 = vmul.f32 %v274, 0.0051020407
      %v592 = vmul.f32 %v278, 0.0051020407
      %v593 = vmul.f32 %v282, 0.0051020407
      %v594 = vmul.f32 %v286, 0.0051020407
      %v595 = vmul.f32 %v290, 0.0051020407
      %v596 = vmul.f32 %v294, 0.0051020407
      %v597 = vmul.f32 %v298, 0.0051020407
      %v598 = vmul.f32 %v302, 0.0051020407
      %v599 = vmul.f32 %v306, 0.0051020407
      %v600 = vmul.f32 %v310, 0.0051020407
      %v601 = vmul.f32 %v314, 0.0051020407
      %v602 = vmul.f32 %v318, 0.0051020407
      %v603 = vmul.f32 %v322, 0.0051020407
      %v604 = vmul.f32 %v326, 0.0051020407
      %v605 = vmul.f32 %v330, 0.0051020407
      %v606 = vmul.f32 %v334, 0.0051020407
      %v607 = vmul.f32 %v338, 0.0051020407
      %v608 = vmul.f32 %v342, 0.0051020407
      %v609 = vmul.f32 %v346, 0.0051020407
      %v610 = vmul.f32 %v350, 0.0051020407
      %v611 = vmul.f32 %v354, 0.0051020407
      %v612 = vmul.f32 %v358, 0.0051020407
      %v613 = vmul.f32 %v362, 0.0051020407
      %v614 = vmul.f32 %v366, 0.0051020407
      %v615 = vmul.f32 %v370, 0.0051020407
      %v616 = vmul.f32 %v374, 0.0051020407
      %v617 = vmul.f32 %v378, 0.0051020407
      %v618 = vmul.f32 %v382, 0.0051020407
      %v619 = vmul.f32 %v386, 0.0051020407
      %v620 = vmul.f32 %v390, 0.0051020407
      %v621 = vmul.f32 %v394, 0.0051020407
      %v622 = vmul.f32 %v398, 0.0051020407
      %v623 = vmul.f32 %v466, 0.0051020407
      %v624 = vmul.f32 %v470, 0.0051020407
      %v625 = vmul.f32 %v474, 0.0051020407
      %v626 = vmul.f32 %v478, 0.0051020407
      %v627 = vmul.f32 %v482, 0.0051020407
      %v628 = vmul.f32 %v486, 0.0051020407
      %v629 = vmul.f32 %v490, 0.0051020407
      %v630 = vmul.f32 %v494, 0.0051020407
      %v631 = vmul.f32 %v498, 0.0051020407
      %v632 = vmul.f32 %v502, 0.0051020407
      %v633 = vmul.f32 %v506, 0.0051020407
      %v634 = vmul.f32 %v510, 0.0051020407
      %v635 = vmul.f32 %v514, 0.0051020407
      %v636 = vmul.f32 %v518, 0.0051020407
      %v637 = vmul.f32 %v522, 0.0051020407
      %v638 = vmul.f32 %v526, 0.0051020407
      %v639 = vmul.f32 %v530, 0.0051020407
      %v640 = vmul.f32 %v534, 0.0051020407
      %v641 = vmul.f32 %v538, 0.0051020407
      %v642 = vmul.f32 %v542, 0.0051020407
      %v643 = vmul.f32 %v546, 0.0051020407
      %v644 = vmul.f32 %v550, 0.0051020407
      %v645 = vmul.f32 %v554, 0.0051020407
      %v646 = vmul.f32 %v558, 0.0051020407
      %v647 = vmul.f32 %v562, 0.0051020407
      %v648 = vmul.f32 %v566, 0.0051020407
      %v649 = vmul.f32 %v570, 0.0051020407
      %v650 = vmul.f32 %v574, 0.0051020407
      %v651 = vmul.f32 %v578, 0.0051020407
      %v652 = vmul.f32 %v582, 0.0051020407
      %v653 = vmul.f32 %v586, 0.0051020407
      %v654 = vmul.f32 %v590, 0.0051020407
      %v655 = vmul.f32 %v591, %v591
      %v656 = vmul.f32 %v592, %v592
      %v657 = vmul.f32 %v593, %v593
      %v658 = vmul.f32 %v594, %v594
      %v659 = vmul.f32 %v595, %v595
      %v660 = vmul.f32 %v596, %v596
      %v661 = vmul.f32 %v597, %v597
      %v662 = vmul.f32 %v598, %v598
      %v663 = vmul.f32 %v599, %v599
      %v664 = vmul.f32 %v600, %v600
      %v665 = vmul.f32 %v601, %v601
      %v666 = vmul.f32 %v602, %v602
      %v667 = vmul.f32 %v603, %v603
      %v668 = vmul.f32 %v604, %v604
      %v669 = vmul.f32 %v605, %v605
      %v670 = vmul.f32 %v606, %v606
      %v671 = vmul.f32 %v607, %v607
      %v672 = vmul.f32 %v608, %v608
      %v673 = vmul.f32 %v609, %v609
      %v674 = vmul.f32 %v610, %v610
      %v675 = vmul.f32 %v611, %v611
      %v676 = vmul.f32 %v612, %v612
      %v677 = vmul.f32 %v613, %v613
      %v678 = vmul.f32 %v614, %v614
      %v679 = vmul.f32 %v615, %v615
      %v680 = vmul.f32 %v616, %v616
      %v681 = vmul.f32 %v617, %v617
      %v682 = vmul.f32 %v618, %v618
      %v683 = vmul.f32 %v619, %v619
      %v684 = vmul.f32 %v620, %v620
      %v685 = vmul.f32 %v621, %v621
      %v686 = vmul.f32 %v622, %v622
      %v687 = vsub.f32 %v623, %v655
      %v688 = vsub.f32 %v624, %v656
      %v689 = vsub.f32 %v625, %v657
      %v690 = vsub.f32 %v626, %v658
      %v691 = vsub.f32 %v627, %v659
      %v692 = vsub.f32 %v628, %v660
      %v693 = vsub.f32 %v629, %v661
      %v694 = vsub.f32 %v630, %v662
      %v695 = vsub.f32 %v631, %v663
      %v696 = vsub.f32 %v632, %v664
      %v697 = vsub.f32 %v633, %v665
      %v698 = vsub.f32 %v634, %v666
      %v699 = vsub.f32 %v635, %v667
      %v700 = vsub.f32 %v636, %v668
      %v701 = vsub.f32 %v637, %v669
      %v702 = vsub.f32 %v638, %v670
      %v703 = vsub.f32 %v639, %v671
      %v704 = vsub.f32 %v640, %v672
      %v705 = vsub.f32 %v641, %v673
      %v706 = vsub.f32 %v642, %v674
      %v707 = vsub.f32 %v643, %v675
      %v708 = vsub.f32 %v644, %v676
      %v709 = vsub.f32 %v645, %v677
      %v710 = vsub.f32 %v646, %v678
      %v711 = vsub.f32 %v647, %v679
      %v712 = vsub.f32 %v648, %v680
      %v713 = vsub.f32 %v649, %v681
      %v714 = vsub.f32 %v650, %v682
      %v715 = vsub.f32 %v651, %v683
      %v716 = vsub.f32 %v652, %v684
      %v717 = vsub.f32 %v653, %v685
      %v718 = vsub.f32 %v654, %v686
      %v719 = vld [vmem:[%s1] sm:$0xff]
      %v720 = vld [vmem:[%s1 + $0x8] sm:$0xff]
      %v721 = vld [vmem:[%s1 + $0x10] sm:$0xff]
      %v722 = vld [vmem:[%s1 + $0x18] sm:$0xff]
      %v723 = vld [vmem:[%s1 + $0x20] sm:$0xff]
      %v724 = vld [vmem:[%s1 + $0x28] sm:$0xff]
      %v725 = vld [vmem:[%s1 + $0x30] sm:$0xff]
      %v726 = vld [vmem:[%s1 + $0x38] sm:$0xff]
      %v727 = vld [vmem:[%s1 + $0x40] sm:$0xff]
      %v728 = vld [vmem:[%s1 + $0x48] sm:$0xff]
      %v729 = vld [vmem:[%s1 + $0x50] sm:$0xff]
      %v730 = vld [vmem:[%s1 + $0x58] sm:$0xff]
      %v731 = vld [vmem:[%s1 + $0x60] sm:$0xff]
      %v732 = vld [vmem:[%s1 + $0x68] sm:$0xff]
      %v733 = vld [vmem:[%s1 + $0x70] sm:$0xff]
      %v734 = vld [vmem:[%s1 + $0x78] sm:$0xff]
      %v735 = vld [vmem:[%s1 + $0x80] sm:$0xff]
      %v736 = vld [vmem:[%s1 + $0x88] sm:$0xff]
      %v737 = vld [vmem:[%s1 + $0x90] sm:$0xff]
      %v738 = vld [vmem:[%s1 + $0x98] sm:$0xff]
      %v739 = vld [vmem:[%s1 + $0xa0] sm:$0xff]
      %v740 = vld [vmem:[%s1 + $0xa8] sm:$0xff]
      %v741 = vld [vmem:[%s1 + $0xb0] sm:$0xff]
      %v742 = vld [vmem:[%s1 + $0xb8] sm:$0xff]
      %v743 = vld [vmem:[%s1 + $0xc0] sm:$0xff]
      %v744 = vld [vmem:[%s1 + $0xc8] sm:$0xff]
      %v745 = vld [vmem:[%s1 + $0xd0] sm:$0xff]
      %v746 = vld [vmem:[%s1 + $0xd8] sm:$0xff]
      %v747 = vld [vmem:[%s1 + $0xe0] sm:$0xff]
      %v748 = vld [vmem:[%s1 + $0xe8] sm:$0xff]
      %v749 = vld [vmem:[%s1 + $0xf0] sm:$0xff]
      %v750 = vld [vmem:[%s1 + $0xf8] sm:$0xff]
      %v751 = vadd.f32 %v687, 1e-05
      %v752 = vadd.f32 %v688, 1e-05
      %v753 = vadd.f32 %v689, 1e-05
      %v754 = vadd.f32 %v690, 1e-05
      %v755 = vadd.f32 %v691, 1e-05
      %v756 = vadd.f32 %v692, 1e-05
      %v757 = vadd.f32 %v693, 1e-05
      %v758 = vadd.f32 %v694, 1e-05
      %v759 = vadd.f32 %v695, 1e-05
      %v760 = vadd.f32 %v696, 1e-05
      %v761 = vadd.f32 %v697, 1e-05
      %v762 = vadd.f32 %v698, 1e-05
      %v763 = vadd.f32 %v699, 1e-05
      %v764 = vadd.f32 %v700, 1e-05
      %v765 = vadd.f32 %v701, 1e-05
      %v766 = vadd.f32 %v702, 1e-05
      %v767 = vadd.f32 %v703, 1e-05
      %v768 = vadd.f32 %v704, 1e-05
      %v769 = vadd.f32 %v705, 1e-05
      %v770 = vadd.f32 %v706, 1e-05
      %v771 = vadd.f32 %v707, 1e-05
      %v772 = vadd.f32 %v708, 1e-05
      %v773 = vadd.f32 %v709, 1e-05
      %v774 = vadd.f32 %v710, 1e-05
      %v775 = vadd.f32 %v711, 1e-05
      %v776 = vadd.f32 %v712, 1e-05
      %v777 = vadd.f32 %v713, 1e-05
      %v778 = vadd.f32 %v714, 1e-05
      %v779 = vadd.f32 %v715, 1e-05
      %v780 = vadd.f32 %v716, 1e-05
      %v781 = vadd.f32 %v717, 1e-05
      %v782 = vadd.f32 %v718, 1e-05
      %v783 = vrsqrt.pop %v751
      %v784 = vrsqrt.pop %v752
      %v785 = vrsqrt.pop %v753
      %v786 = vrsqrt.pop %v754
      %v787 = vrsqrt.pop %v755
      %v788 = vrsqrt.pop %v756
      %v789 = vrsqrt.pop %v757
      %v790 = vrsqrt.pop %v758
      %v791 = vrsqrt.pop %v759
      %v792 = vrsqrt.pop %v760
      %v793 = vrsqrt.pop %v761
      %v794 = vrsqrt.pop %v762
      %v795 = vrsqrt.pop %v763
      %v796 = vrsqrt.pop %v764
      %v797 = vrsqrt.pop %v765
      %v798 = vrsqrt.pop %v766
      %v799 = vrsqrt.pop %v767
      %v800 = vrsqrt.pop %v768
      %v801 = vrsqrt.pop %v769
      %v802 = vrsqrt.pop %v770
      %v803 = vrsqrt.pop %v771
      %v804 = vrsqrt.pop %v772
      %v805 = vrsqrt.pop %v773
      %v806 = vrsqrt.pop %v774
      %v807 = vrsqrt.pop %v775
      %v808 = vrsqrt.pop %v776
      %v809 = vrsqrt.pop %v777
      %v810 = vrsqrt.pop %v778
      %v811 = vrsqrt.pop %v779
      %v812 = vrsqrt.pop %v780
      %v813 = vrsqrt.pop %v781
      %v814 = vrsqrt.pop %v782
      %v815 = vmul.f32 %v719, %v783
      %v816 = vmul.f32 %v720, %v784
      %v817 = vmul.f32 %v721, %v785
      %v818 = vmul.f32 %v722, %v786
      %v819 = vmul.f32 %v723, %v787
      %v820 = vmul.f32 %v724, %v788
      %v821 = vmul.f32 %v725, %v789
      %v822 = vmul.f32 %v726, %v790
      %v823 = vmul.f32 %v727, %v791
      %v824 = vmul.f32 %v728, %v792
      %v825 = vmul.f32 %v729, %v793
      %v826 = vmul.f32 %v730, %v794
      %v827 = vmul.f32 %v731, %v795
      %v828 = vmul.f32 %v732, %v796
      %v829 = vmul.f32 %v733, %v797
      %v830 = vmul.f32 %v734, %v798
      %v831 = vmul.f32 %v735, %v799
      %v832 = vmul.f32 %v736, %v800
      %v833 = vmul.f32 %v737, %v801
      %v834 = vmul.f32 %v738, %v802
      %v835 = vmul.f32 %v739, %v803
      %v836 = vmul.f32 %v740, %v804
      %v837 = vmul.f32 %v741, %v805
      %v838 = vmul.f32 %v742, %v806
      %v839 = vmul.f32 %v743, %v807
      %v840 = vmul.f32 %v744, %v808
      %v841 = vmul.f32 %v745, %v809
      %v842 = vmul.f32 %v746, %v810
      %v843 = vmul.f32 %v747, %v811
      %v844 = vmul.f32 %v748, %v812
      %v845 = vmul.f32 %v749, %v813
      %v846 = vmul.f32 %v750, %v814
      %v847 = vld [vmem:[%s2] sm:$0xff]
      %v848 = vld [vmem:[%s2 + $0x8] sm:$0xff]
      %v849 = vld [vmem:[%s2 + $0x10] sm:$0xff]
      %v850 = vld [vmem:[%s2 + $0x18] sm:$0xff]
      %v851 = vld [vmem:[%s2 + $0x20] sm:$0xff]
      %v852 = vld [vmem:[%s2 + $0x28] sm:$0xff]
      %v853 = vld [vmem:[%s2 + $0x30] sm:$0xff]
      %v854 = vld [vmem:[%s2 + $0x38] sm:$0xff]
      %v855 = vld [vmem:[%s2 + $0x40] sm:$0xff]
      %v856 = vld [vmem:[%s2 + $0x48] sm:$0xff]
      %v857 = vld [vmem:[%s2 + $0x50] sm:$0xff]
      %v858 = vld [vmem:[%s2 + $0x58] sm:$0xff]
      %v859 = vld [vmem:[%s2 + $0x60] sm:$0xff]
      %v860 = vld [vmem:[%s2 + $0x68] sm:$0xff]
      %v861 = vld [vmem:[%s2 + $0x70] sm:$0xff]
      %v862 = vld [vmem:[%s2 + $0x78] sm:$0xff]
      %v863 = vld [vmem:[%s2 + $0x80] sm:$0xff]
      %v864 = vld [vmem:[%s2 + $0x88] sm:$0xff]
      %v865 = vld [vmem:[%s2 + $0x90] sm:$0xff]
      %v866 = vld [vmem:[%s2 + $0x98] sm:$0xff]
      %v867 = vld [vmem:[%s2 + $0xa0] sm:$0xff]
      %v868 = vld [vmem:[%s2 + $0xa8] sm:$0xff]
      %v869 = vld [vmem:[%s2 + $0xb0] sm:$0xff]
      %v870 = vld [vmem:[%s2 + $0xb8] sm:$0xff]
      %v871 = vld [vmem:[%s2 + $0xc0] sm:$0xff]
      %v872 = vld [vmem:[%s2 + $0xc8] sm:$0xff]
      %v873 = vld [vmem:[%s2 + $0xd0] sm:$0xff]
      %v874 = vld [vmem:[%s2 + $0xd8] sm:$0xff]
      %v875 = vld [vmem:[%s2 + $0xe0] sm:$0xff]
      %v876 = vld [vmem:[%s2 + $0xe8] sm:$0xff]
      %v877 = vld [vmem:[%s2 + $0xf0] sm:$0xff]
      %v878 = vld [vmem:[%s2 + $0xf8] sm:$0xff]
      %v879 = vmul.f32 %v591, %v815
      %v880 = vmul.f32 %v592, %v816
      %v881 = vmul.f32 %v593, %v817
      %v882 = vmul.f32 %v594, %v818
      %v883 = vmul.f32 %v595, %v819
      %v884 = vmul.f32 %v596, %v820
      %v885 = vmul.f32 %v597, %v821
      %v886 = vmul.f32 %v598, %v822
      %v887 = vmul.f32 %v599, %v823
      %v888 = vmul.f32 %v600, %v824
      %v889 = vmul.f32 %v601, %v825
      %v890 = vmul.f32 %v602, %v826
      %v891 = vmul.f32 %v603, %v827
      %v892 = vmul.f32 %v604, %v828
      %v893 = vmul.f32 %v605, %v829
      %v894 = vmul.f32 %v606, %v830
      %v895 = vmul.f32 %v607, %v831
      %v896 = vmul.f32 %v608, %v832
      %v897 = vmul.f32 %v609, %v833
      %v898 = vmul.f32 %v610, %v834
      %v899 = vmul.f32 %v611, %v835
      %v900 = vmul.f32 %v612, %v836
      %v901 = vmul.f32 %v613, %v837
      %v902 = vmul.f32 %v614, %v838
      %v903 = vmul.f32 %v615, %v839
      %v904 = vmul.f32 %v616, %v840
      %v905 = vmul.f32 %v617, %v841
      %v906 = vmul.f32 %v618, %v842
      %v907 = vmul.f32 %v619, %v843
      %v908 = vmul.f32 %v620, %v844
      %v909 = vmul.f32 %v621, %v845
      %v910 = vmul.f32 %v622, %v846
      %v911 = vsub.f32 %v847, %v879
      %v912 = vsub.f32 %v848, %v880
      %v913 = vsub.f32 %v849, %v881
      %v914 = vsub.f32 %v850, %v882
      %v915 = vsub.f32 %v851, %v883
      %v916 = vsub.f32 %v852, %v884
      %v917 = vsub.f32 %v853, %v885
      %v918 = vsub.f32 %v854, %v886
      %v919 = vsub.f32 %v855, %v887
      %v920 = vsub.f32 %v856, %v888
      %v921 = vsub.f32 %v857, %v889
      %v922 = vsub.f32 %v858, %v890
      %v923 = vsub.f32 %v859, %v891
      %v924 = vsub.f32 %v860, %v892
      %v925 = vsub.f32 %v861, %v893
      %v926 = vsub.f32 %v862, %v894
      %v927 = vsub.f32 %v863, %v895
      %v928 = vsub.f32 %v864, %v896
      %v929 = vsub.f32 %v865, %v897
      %v930 = vsub.f32 %v866, %v898
      %v931 = vsub.f32 %v867, %v899
      %v932 = vsub.f32 %v868, %v900
      %v933 = vsub.f32 %v869, %v901
      %v934 = vsub.f32 %v870, %v902
      %v935 = vsub.f32 %v871, %v903
      %v936 = vsub.f32 %v872, %v904
      %v937 = vsub.f32 %v873, %v905
      %v938 = vsub.f32 %v874, %v906
      %v939 = vsub.f32 %v875, %v907
      %v940 = vsub.f32 %v876, %v908
      %v941 = vsub.f32 %v877, %v909
      %v942 = vsub.f32 %v878, %v910
      %944 = vset.pattern.permute.xlu0 0
      %945 = vperm.xlu0 %944, %v815
      %v946 = vpop.permute.xlu0 %945
      %949 = vset.pattern.permute.xlu0 0
      %950 = vperm.xlu0 %949, %v816
      %v951 = vpop.permute.xlu0 %950
      %954 = vset.pattern.permute.xlu0 0
      %955 = vperm.xlu0 %954, %v817
      %v956 = vpop.permute.xlu0 %955
      %959 = vset.pattern.permute.xlu0 0
      %960 = vperm.xlu0 %959, %v818
      %v961 = vpop.permute.xlu0 %960
      %964 = vset.pattern.permute.xlu0 0
      %965 = vperm.xlu0 %964, %v819
      %v966 = vpop.permute.xlu0 %965
      %969 = vset.pattern.permute.xlu0 0
      %970 = vperm.xlu0 %969, %v820
      %v971 = vpop.permute.xlu0 %970
      %974 = vset.pattern.permute.xlu0 0
      %975 = vperm.xlu0 %974, %v821
      %v976 = vpop.permute.xlu0 %975
      %979 = vset.pattern.permute.xlu0 0
      %980 = vperm.xlu0 %979, %v822
      %v981 = vpop.permute.xlu0 %980
      %984 = vset.pattern.permute.xlu0 0
      %985 = vperm.xlu0 %984, %v823
      %v986 = vpop.permute.xlu0 %985
      %989 = vset.pattern.permute.xlu0 0
      %990 = vperm.xlu0 %989, %v824
      %v991 = vpop.permute.xlu0 %990
      %994 = vset.pattern.permute.xlu0 0
      %995 = vperm.xlu0 %994, %v825
      %v996 = vpop.permute.xlu0 %995
      %999 = vset.pattern.permute.xlu0 0
      %1000 = vperm.xlu0 %999, %v826
      %v1001 = vpop.permute.xlu0 %1000
      %1004 = vset.pattern.permute.xlu0 0
      %1005 = vperm.xlu0 %1004, %v827
      %v1006 = vpop.permute.xlu0 %1005
      %1009 = vset.pattern.permute.xlu0 0
      %1010 = vperm.xlu0 %1009, %v828
      %v1011 = vpop.permute.xlu0 %1010
      %1014 = vset.pattern.permute.xlu0 0
      %1015 = vperm.xlu0 %1014, %v829
      %v1016 = vpop.permute.xlu0 %1015
      %1019 = vset.pattern.permute.xlu0 0
      %1020 = vperm.xlu0 %1019, %v830
      %v1021 = vpop.permute.xlu0 %1020
      %1024 = vset.pattern.permute.xlu0 0
      %1025 = vperm.xlu0 %1024, %v831
      %v1026 = vpop.permute.xlu0 %1025
      %1029 = vset.pattern.permute.xlu0 0
      %1030 = vperm.xlu0 %1029, %v832
      %v1031 = vpop.permute.xlu0 %1030
      %1034 = vset.pattern.permute.xlu0 0
      %1035 = vperm.xlu0 %1034, %v833
      %v1036 = vpop.permute.xlu0 %1035
      %1039 = vset.pattern.permute.xlu0 0
      %1040 = vperm.xlu0 %1039, %v834
      %v1041 = vpop.permute.xlu0 %1040
      %1044 = vset.pattern.permute.xlu0 0
      %1045 = vperm.xlu0 %1044, %v835
      %v1046 = vpop.permute.xlu0 %1045
      %1049 = vset.pattern.permute.xlu0 0
      %1050 = vperm.xlu0 %1049, %v836
      %v1051 = vpop.permute.xlu0 %1050
      %1054 = vset.pattern.permute.xlu0 0
      %1055 = vperm.xlu0 %1054, %v837
      %v1056 = vpop.permute.xlu0 %1055
      %1059 = vset.pattern.permute.xlu0 0
      %1060 = vperm.xlu0 %1059, %v838
      %v1061 = vpop.permute.xlu0 %1060
      %1064 = vset.pattern.permute.xlu0 0
      %1065 = vperm.xlu0 %1064, %v839
      %v1066 = vpop.permute.xlu0 %1065
      %1069 = vset.pattern.permute.xlu0 0
      %1070 = vperm.xlu0 %1069, %v840
      %v1071 = vpop.permute.xlu0 %1070
      %1074 = vset.pattern.permute.xlu0 0
      %1075 = vperm.xlu0 %1074, %v841
      %v1076 = vpop.permute.xlu0 %1075
      %1079 = vset.pattern.permute.xlu0 0
      %1080 = vperm.xlu0 %1079, %v842
      %v1081 = vpop.permute.xlu0 %1080
      %1084 = vset.pattern.permute.xlu0 0
      %1085 = vperm.xlu0 %1084, %v843
      %v1086 = vpop.permute.xlu0 %1085
      %1089 = vset.pattern.permute.xlu0 0
      %1090 = vperm.xlu0 %1089, %v844
      %v1091 = vpop.permute.xlu0 %1090
      %1094 = vset.pattern.permute.xlu0 0
      %1095 = vperm.xlu0 %1094, %v845
      %v1096 = vpop.permute.xlu0 %1095
      %1099 = vset.pattern.permute.xlu0 0
      %1100 = vperm.xlu0 %1099, %v846
      %v1101 = vpop.permute.xlu0 %1100
      %v1103 = vmul.f32 %v206, %v946
      %v1104 = vmul.f32 %v207, %v946
      %v1105 = vmul.f32 %v208, %v951
      %v1106 = vmul.f32 %v209, %v951
      %v1107 = vmul.f32 %v210, %v956
      %v1108 = vmul.f32 %v211, %v956
      %v1109 = vmul.f32 %v212, %v961
      %v1110 = vmul.f32 %v213, %v961
      %v1111 = vmul.f32 %v214, %v966
      %v1112 = vmul.f32 %v215, %v966
      %v1113 = vmul.f32 %v216, %v971
      %v1114 = vmul.f32 %v217, %v971
      %v1115 = vmul.f32 %v218, %v976
      %v1116 = vmul.f32 %v219, %v976
      %v1117 = vmul.f32 %v220, %v981
      %v1118 = vmul.f32 %v221, %v981
      %v1119 = vmul.f32 %v222, %v986
      %v1120 = vmul.f32 %v223, %v986
      %v1121 = vmul.f32 %v224, %v991
      %v1122 = vmul.f32 %v225, %v991
      %v1123 = vmul.f32 %v226, %v996
      %v1124 = vmul.f32 %v227, %v996
      %v1125 = vmul.f32 %v228, %v1001
      %v1126 = vmul.f32 %v229, %v1001
      %v1127 = vmul.f32 %v230, %v1006
      %v1128 = vmul.f32 %v231, %v1006
      %v1129 = vmul.f32 %v232, %v1011
      %v1130 = vmul.f32 %v233, %v1011
      %v1131 = vmul.f32 %v234, %v1016
      %v1132 = vmul.f32 %v235, %v1016
      %v1133 = vmul.f32 %v236, %v1021
      %v1134 = vmul.f32 %v237, %v1021
      %v1135 = vmul.f32 %v238, %v1026
      %v1136 = vmul.f32 %v239, %v1026
      %v1137 = vmul.f32 %v240, %v1031
      %v1138 = vmul.f32 %v241, %v1031
      %v1139 = vmul.f32 %v242, %v1036
      %v1140 = vmul.f32 %v243, %v1036
      %v1141 = vmul.f32 %v244, %v1041
      %v1142 = vmul.f32 %v245, %v1041
      %v1143 = vmul.f32 %v246, %v1046
      %v1144 = vmul.f32 %v247, %v1046
      %v1145 = vmul.f32 %v248, %v1051
      %v1146 = vmul.f32 %v249, %v1051
      %v1147 = vmul.f32 %v250, %v1056
      %v1148 = vmul.f32 %v251, %v1056
      %v1149 = vmul.f32 %v252, %v1061
      %v1150 = vmul.f32 %v253, %v1061
      %v1151 = vmul.f32 %v254, %v1066
      %v1152 = vmul.f32 %v255, %v1066
      %v1153 = vmul.f32 %v256, %v1071
      %v1154 = vmul.f32 %v257, %v1071
      %v1155 = vmul.f32 %v258, %v1076
      %v1156 = vmul.f32 %v259, %v1076
      %v1157 = vmul.f32 %v260, %v1081
      %v1158 = vmul.f32 %v261, %v1081
      %v1159 = vmul.f32 %v262, %v1086
      %v1160 = vmul.f32 %v263, %v1086
      %v1161 = vmul.f32 %v264, %v1091
      %v1162 = vmul.f32 %v265, %v1091
      %v1163 = vmul.f32 %v266, %v1096
      %v1164 = vmul.f32 %v267, %v1096
      %v1165 = vmul.f32 %v268, %v1101
      %v1166 = vmul.f32 %v269, %v1101
      %1168 = vset.pattern.permute.xlu0 0
      %1169 = vperm.xlu0 %1168, %v911
      %v1170 = vpop.permute.xlu0 %1169
      %1173 = vset.pattern.permute.xlu0 0
      %1174 = vperm.xlu0 %1173, %v912
      %v1175 = vpop.permute.xlu0 %1174
      %1178 = vset.pattern.permute.xlu0 0
      %1179 = vperm.xlu0 %1178, %v913
      %v1180 = vpop.permute.xlu0 %1179
      %1183 = vset.pattern.permute.xlu0 0
      %1184 = vperm.xlu0 %1183, %v914
      %v1185 = vpop.permute.xlu0 %1184
      %1188 = vset.pattern.permute.xlu0 0
      %1189 = vperm.xlu0 %1188, %v915
      %v1190 = vpop.permute.xlu0 %1189
      %1193 = vset.pattern.permute.xlu0 0
      %1194 = vperm.xlu0 %1193, %v916
      %v1195 = vpop.permute.xlu0 %1194
      %1198 = vset.pattern.permute.xlu0 0
      %1199 = vperm.xlu0 %1198, %v917
      %v1200 = vpop.permute.xlu0 %1199
      %1203 = vset.pattern.permute.xlu0 0
      %1204 = vperm.xlu0 %1203, %v918
      %v1205 = vpop.permute.xlu0 %1204
      %1208 = vset.pattern.permute.xlu0 0
      %1209 = vperm.xlu0 %1208, %v919
      %v1210 = vpop.permute.xlu0 %1209
      %1213 = vset.pattern.permute.xlu0 0
      %1214 = vperm.xlu0 %1213, %v920
      %v1215 = vpop.permute.xlu0 %1214
      %1218 = vset.pattern.permute.xlu0 0
      %1219 = vperm.xlu0 %1218, %v921
      %v1220 = vpop.permute.xlu0 %1219
      %1223 = vset.pattern.permute.xlu0 0
      %1224 = vperm.xlu0 %1223, %v922
      %v1225 = vpop.permute.xlu0 %1224
      %1228 = vset.pattern.permute.xlu0 0
      %1229 = vperm.xlu0 %1228, %v923
      %v1230 = vpop.permute.xlu0 %1229
      %1233 = vset.pattern.permute.xlu0 0
      %1234 = vperm.xlu0 %1233, %v924
      %v1235 = vpop.permute.xlu0 %1234
      %1238 = vset.pattern.permute.xlu0 0
      %1239 = vperm.xlu0 %1238, %v925
      %v1240 = vpop.permute.xlu0 %1239
      %1243 = vset.pattern.permute.xlu0 0
      %1244 = vperm.xlu0 %1243, %v926
      %v1245 = vpop.permute.xlu0 %1244
      %1248 = vset.pattern.permute.xlu0 0
      %1249 = vperm.xlu0 %1248, %v927
      %v1250 = vpop.permute.xlu0 %1249
      %1253 = vset.pattern.permute.xlu0 0
      %1254 = vperm.xlu0 %1253, %v928
      %v1255 = vpop.permute.xlu0 %1254
      %1258 = vset.pattern.permute.xlu0 0
      %1259 = vperm.xlu0 %1258, %v929
      %v1260 = vpop.permute.xlu0 %1259
      %1263 = vset.pattern.permute.xlu0 0
      %1264 = vperm.xlu0 %1263, %v930
      %v1265 = vpop.permute.xlu0 %1264
      %1268 = vset.pattern.permute.xlu0 0
      %1269 = vperm.xlu0 %1268, %v931
      %v1270 = vpop.permute.xlu0 %1269
      %1273 = vset.pattern.permute.xlu0 0
      %1274 = vperm.xlu0 %1273, %v932
      %v1275 = vpop.permute.xlu0 %1274
      %1278 = vset.pattern.permute.xlu0 0
      %1279 = vperm.xlu0 %1278, %v933
      %v1280 = vpop.permute.xlu0 %1279
      %1283 = vset.pattern.permute.xlu0 0
      %1284 = vperm.xlu0 %1283, %v934
      %v1285 = vpop.permute.xlu0 %1284
      %1288 = vset.pattern.permute.xlu0 0
      %1289 = vperm.xlu0 %1288, %v935
      %v1290 = vpop.permute.xlu0 %1289
      %1293 = vset.pattern.permute.xlu0 0
      %1294 = vperm.xlu0 %1293, %v936
      %v1295 = vpop.permute.xlu0 %1294
      %1298 = vset.pattern.permute.xlu0 0
      %1299 = vperm.xlu0 %1298, %v937
      %v1300 = vpop.permute.xlu0 %1299
      %1303 = vset.pattern.permute.xlu0 0
      %1304 = vperm.xlu0 %1303, %v938
      %v1305 = vpop.permute.xlu0 %1304
      %1308 = vset.pattern.permute.xlu0 0
      %1309 = vperm.xlu0 %1308, %v939
      %v1310 = vpop.permute.xlu0 %1309
      %1313 = vset.pattern.permute.xlu0 0
      %1314 = vperm.xlu0 %1313, %v940
      %v1315 = vpop.permute.xlu0 %1314
      %1318 = vset.pattern.permute.xlu0 0
      %1319 = vperm.xlu0 %1318, %v941
      %v1320 = vpop.permute.xlu0 %1319
      %1323 = vset.pattern.permute.xlu0 0
      %1324 = vperm.xlu0 %1323, %v942
      %v1325 = vpop.permute.xlu0 %1324
      %v1327 = vadd.f32 %v1103, %v1170
      %v1328 = vadd.f32 %v1104, %v1170
      %v1329 = vadd.f32 %v1105, %v1175
      %v1330 = vadd.f32 %v1106, %v1175
      %v1331 = vadd.f32 %v1107, %v1180
      %v1332 = vadd.f32 %v1108, %v1180
      %v1333 = vadd.f32 %v1109, %v1185
      %v1334 = vadd.f32 %v1110, %v1185
      %v1335 = vadd.f32 %v1111, %v1190
      %v1336 = vadd.f32 %v1112, %v1190
      %v1337 = vadd.f32 %v1113, %v1195
      %v1338 = vadd.f32 %v1114, %v1195
      %v1339 = vadd.f32 %v1115, %v1200
      %v1340 = vadd.f32 %v1116, %v1200
      %v1341 = vadd.f32 %v1117, %v1205
      %v1342 = vadd.f32 %v1118, %v1205
      %v1343 = vadd.f32 %v1119, %v1210
      %v1344 = vadd.f32 %v1120, %v1210
      %v1345 = vadd.f32 %v1121, %v1215
      %v1346 = vadd.f32 %v1122, %v1215
      %v1347 = vadd.f32 %v1123, %v1220
      %v1348 = vadd.f32 %v1124, %v1220
      %v1349 = vadd.f32 %v1125, %v1225
      %v1350 = vadd.f32 %v1126, %v1225
      %v1351 = vadd.f32 %v1127, %v1230
      %v1352 = vadd.f32 %v1128, %v1230
      %v1353 = vadd.f32 %v1129, %v1235
      %v1354 = vadd.f32 %v1130, %v1235
      %v1355 = vadd.f32 %v1131, %v1240
      %v1356 = vadd.f32 %v1132, %v1240
      %v1357 = vadd.f32 %v1133, %v1245
      %v1358 = vadd.f32 %v1134, %v1245
      %v1359 = vadd.f32 %v1135, %v1250
      %v1360 = vadd.f32 %v1136, %v1250
      %v1361 = vadd.f32 %v1137, %v1255
      %v1362 = vadd.f32 %v1138, %v1255
      %v1363 = vadd.f32 %v1139, %v1260
      %v1364 = vadd.f32 %v1140, %v1260
      %v1365 = vadd.f32 %v1141, %v1265
      %v1366 = vadd.f32 %v1142, %v1265
      %v1367 = vadd.f32 %v1143, %v1270
      %v1368 = vadd.f32 %v1144, %v1270
      %v1369 = vadd.f32 %v1145, %v1275
      %v1370 = vadd.f32 %v1146, %v1275
      %v1371 = vadd.f32 %v1147, %v1280
      %v1372 = vadd.f32 %v1148, %v1280
      %v1373 = vadd.f32 %v1149, %v1285
      %v1374 = vadd.f32 %v1150, %v1285
      %v1375 = vadd.f32 %v1151, %v1290
      %v1376 = vadd.f32 %v1152, %v1290
      %v1377 = vadd.f32 %v1153, %v1295
      %v1378 = vadd.f32 %v1154, %v1295
      %v1379 = vadd.f32 %v1155, %v1300
      %v1380 = vadd.f32 %v1156, %v1300
      %v1381 = vadd.f32 %v1157, %v1305
      %v1382 = vadd.f32 %v1158, %v1305
      %v1383 = vadd.f32 %v1159, %v1310
      %v1384 = vadd.f32 %v1160, %v1310
      %v1385 = vadd.f32 %v1161, %v1315
      %v1386 = vadd.f32 %v1162, %v1315
      %v1387 = vadd.f32 %v1163, %v1320
      %v1388 = vadd.f32 %v1164, %v1320
      %v1389 = vadd.f32 %v1165, %v1325
      %v1390 = vadd.f32 %v1166, %v1325
      %v1391 = vmax.f32 %v1327, 0.0
      %v1392 = vmax.f32 %v1328, 0.0
      %v1393 = vmax.f32 %v1329, 0.0
      %v1394 = vmax.f32 %v1330, 0.0
      %v1395 = vmax.f32 %v1331, 0.0
      %v1396 = vmax.f32 %v1332, 0.0
      %v1397 = vmax.f32 %v1333, 0.0
      %v1398 = vmax.f32 %v1334, 0.0
      %v1399 = vmax.f32 %v1335, 0.0
      %v1400 = vmax.f32 %v1336, 0.0
      %v1401 = vmax.f32 %v1337, 0.0
      %v1402 = vmax.f32 %v1338, 0.0
      %v1403 = vmax.f32 %v1339, 0.0
      %v1404 = vmax.f32 %v1340, 0.0
      %v1405 = vmax.f32 %v1341, 0.0
      %v1406 = vmax.f32 %v1342, 0.0
      %v1407 = vmax.f32 %v1343, 0.0
      %v1408 = vmax.f32 %v1344, 0.0
      %v1409 = vmax.f32 %v1345, 0.0
      %v1410 = vmax.f32 %v1346, 0.0
      %v1411 = vmax.f32 %v1347, 0.0
      %v1412 = vmax.f32 %v1348, 0.0
      %v1413 = vmax.f32 %v1349, 0.0
      %v1414 = vmax.f32 %v1350, 0.0
      %v1415 = vmax.f32 %v1351, 0.0
      %v1416 = vmax.f32 %v1352, 0.0
      %v1417 = vmax.f32 %v1353, 0.0
      %v1418 = vmax.f32 %v1354, 0.0
      %v1419 = vmax.f32 %v1355, 0.0
      %v1420 = vmax.f32 %v1356, 0.0
      %v1421 = vmax.f32 %v1357, 0.0
      %v1422 = vmax.f32 %v1358, 0.0
      %v1423 = vmax.f32 %v1359, 0.0
      %v1424 = vmax.f32 %v1360, 0.0
      %v1425 = vmax.f32 %v1361, 0.0
      %v1426 = vmax.f32 %v1362, 0.0
      %v1427 = vmax.f32 %v1363, 0.0
      %v1428 = vmax.f32 %v1364, 0.0
      %v1429 = vmax.f32 %v1365, 0.0
      %v1430 = vmax.f32 %v1366, 0.0
      %v1431 = vmax.f32 %v1367, 0.0
      %v1432 = vmax.f32 %v1368, 0.0
      %v1433 = vmax.f32 %v1369, 0.0
      %v1434 = vmax.f32 %v1370, 0.0
      %v1435 = vmax.f32 %v1371, 0.0
      %v1436 = vmax.f32 %v1372, 0.0
      %v1437 = vmax.f32 %v1373, 0.0
      %v1438 = vmax.f32 %v1374, 0.0
      %v1439 = vmax.f32 %v1375, 0.0
      %v1440 = vmax.f32 %v1376, 0.0
      %v1441 = vmax.f32 %v1377, 0.0
      %v1442 = vmax.f32 %v1378, 0.0
      %v1443 = vmax.f32 %v1379, 0.0
      %v1444 = vmax.f32 %v1380, 0.0
      %v1445 = vmax.f32 %v1381, 0.0
      %v1446 = vmax.f32 %v1382, 0.0
      %v1447 = vmax.f32 %v1383, 0.0
      %v1448 = vmax.f32 %v1384, 0.0
      %v1449 = vmax.f32 %v1385, 0.0
      %v1450 = vmax.f32 %v1386, 0.0
      %v1451 = vmax.f32 %v1387, 0.0
      %v1452 = vmax.f32 %v1388, 0.0
      %v1453 = vmax.f32 %v1389, 0.0
      %v1454 = vmax.f32 %v1390, 0.0
      %v1455 = vld [vmem:[%s197] sm:$0xff]
      %v1456 = vld [vmem:[%s197 + $0x8] sm:$0xff]
      %v1457 = vld [vmem:[%s197 + $0x10] sm:$0xff]
      %v1458 = vld [vmem:[%s197 + $0x18] sm:$0xff]
      %v1459 = vld [vmem:[%s197 + $0x20] sm:$0xff]
      %v1460 = vld [vmem:[%s197 + $0x28] sm:$0xff]
      %v1461 = vld [vmem:[%s197 + $0x30] sm:$0xff]
      %v1462 = vld [vmem:[%s197 + $0x38] sm:$0xff]
      %v1463 = vld [vmem:[%s197 + $0x40] sm:$0xff]
      %v1464 = vld [vmem:[%s197 + $0x48] sm:$0xff]
      %v1465 = vld [vmem:[%s197 + $0x50] sm:$0xff]
      %v1466 = vld [vmem:[%s197 + $0x58] sm:$0xff]
      %v1467 = vld [vmem:[%s197 + $0x60] sm:$0xff]
      %v1468 = vld [vmem:[%s197 + $0x68] sm:$0xff]
      %v1469 = vld [vmem:[%s197 + $0x70] sm:$0xff]
      %v1470 = vld [vmem:[%s197 + $0x78] sm:$0xff]
      %v1471 = vld [vmem:[%s197 + $0x80] sm:$0xff]
      %v1472 = vld [vmem:[%s197 + $0x88] sm:$0xff]
      %v1473 = vld [vmem:[%s197 + $0x90] sm:$0xff]
      %v1474 = vld [vmem:[%s197 + $0x98] sm:$0xff]
      %v1475 = vld [vmem:[%s197 + $0xa0] sm:$0xff]
      %v1476 = vld [vmem:[%s197 + $0xa8] sm:$0xff]
      %v1477 = vld [vmem:[%s197 + $0xb0] sm:$0xff]
      %v1478 = vld [vmem:[%s197 + $0xb8] sm:$0xff]
      %v1479 = vld [vmem:[%s197 + $0xc0] sm:$0xff]
      %v1480 = vld [vmem:[%s197 + $0xc8] sm:$0xff]
      %v1481 = vld [vmem:[%s197 + $0xd0] sm:$0xff]
      %v1482 = vld [vmem:[%s197 + $0xd8] sm:$0xff]
      %v1483 = vld [vmem:[%s197 + $0xe0] sm:$0xff]
      %v1484 = vld [vmem:[%s197 + $0xe8] sm:$0xff]
      %v1485 = vld [vmem:[%s197 + $0xf0] sm:$0xff]
      %v1486 = vld [vmem:[%s197 + $0xf8] sm:$0xff]
      %v1487 = vld [vmem:[%s197 + $0x100] sm:$0xff]
      %v1488 = vld [vmem:[%s197 + $0x108] sm:$0xff]
      %v1489 = vld [vmem:[%s197 + $0x110] sm:$0xff]
      %v1490 = vld [vmem:[%s197 + $0x118] sm:$0xff]
      %v1491 = vld [vmem:[%s197 + $0x120] sm:$0xff]
      %v1492 = vld [vmem:[%s197 + $0x128] sm:$0xff]
      %v1493 = vld [vmem:[%s197 + $0x130] sm:$0xff]
      %v1494 = vld [vmem:[%s197 + $0x138] sm:$0xff]
      %v1495 = vld [vmem:[%s197 + $0x140] sm:$0xff]
      %v1496 = vld [vmem:[%s197 + $0x148] sm:$0xff]
      %v1497 = vld [vmem:[%s197 + $0x150] sm:$0xff]
      %v1498 = vld [vmem:[%s197 + $0x158] sm:$0xff]
      %v1499 = vld [vmem:[%s197 + $0x160] sm:$0xff]
      %v1500 = vld [vmem:[%s197 + $0x168] sm:$0xff]
      %v1501 = vld [vmem:[%s197 + $0x170] sm:$0xff]
      %v1502 = vld [vmem:[%s197 + $0x178] sm:$0xff]
      %v1503 = vld [vmem:[%s197 + $0x180] sm:$0xff]
      %v1504 = vld [vmem:[%s197 + $0x188] sm:$0xff]
      %v1505 = vld [vmem:[%s197 + $0x190] sm:$0xff]
      %v1506 = vld [vmem:[%s197 + $0x198] sm:$0xff]
      %v1507 = vld [vmem:[%s197 + $0x1a0] sm:$0xff]
      %v1508 = vld [vmem:[%s197 + $0x1a8] sm:$0xff]
      %v1509 = vld [vmem:[%s197 + $0x1b0] sm:$0xff]
      %v1510 = vld [vmem:[%s197 + $0x1b8] sm:$0xff]
      %v1511 = vld [vmem:[%s197 + $0x1c0] sm:$0xff]
      %v1512 = vld [vmem:[%s197 + $0x1c8] sm:$0xff]
      %v1513 = vld [vmem:[%s197 + $0x1d0] sm:$0xff]
      %v1514 = vld [vmem:[%s197 + $0x1d8] sm:$0xff]
      %v1515 = vld [vmem:[%s197 + $0x1e0] sm:$0xff]
      %v1516 = vld [vmem:[%s197 + $0x1e8] sm:$0xff]
      %v1517 = vld [vmem:[%s197 + $0x1f0] sm:$0xff]
      %v1518 = vld [vmem:[%s197 + $0x1f8] sm:$0xff]
      %v1519 = vpack.c.bf16 %v1393, %v1391
      %v1520 = vpack.c.bf16 %v1394, %v1392
      %v1521 = vpack.c.bf16 %v1397, %v1395
      %v1522 = vpack.c.bf16 %v1398, %v1396
      %v1523 = vpack.c.bf16 %v1401, %v1399
      %v1524 = vpack.c.bf16 %v1402, %v1400
      %v1525 = vpack.c.bf16 %v1405, %v1403
      %v1526 = vpack.c.bf16 %v1406, %v1404
      %v1527 = vpack.c.bf16 %v1409, %v1407
      %v1528 = vpack.c.bf16 %v1410, %v1408
      %v1529 = vpack.c.bf16 %v1413, %v1411
      %v1530 = vpack.c.bf16 %v1414, %v1412
      %v1531 = vpack.c.bf16 %v1417, %v1415
      %v1532 = vpack.c.bf16 %v1418, %v1416
      %v1533 = vpack.c.bf16 %v1421, %v1419
      %v1534 = vpack.c.bf16 %v1422, %v1420
      %v1535 = vpack.c.bf16 %v1425, %v1423
      %v1536 = vpack.c.bf16 %v1426, %v1424
      %v1537 = vpack.c.bf16 %v1429, %v1427
      %v1538 = vpack.c.bf16 %v1430, %v1428
      %v1539 = vpack.c.bf16 %v1433, %v1431
      %v1540 = vpack.c.bf16 %v1434, %v1432
      %v1541 = vpack.c.bf16 %v1437, %v1435
      %v1542 = vpack.c.bf16 %v1438, %v1436
      %v1543 = vpack.c.bf16 %v1441, %v1439
      %v1544 = vpack.c.bf16 %v1442, %v1440
      %v1545 = vpack.c.bf16 %v1445, %v1443
      %v1546 = vpack.c.bf16 %v1446, %v1444
      %v1547 = vpack.c.bf16 %v1449, %v1447
      %v1548 = vpack.c.bf16 %v1450, %v1448
      %v1549 = vpack.c.bf16 %v1453, %v1451
      %v1550 = vpack.c.bf16 %v1454, %v1452
      %v1615 = vunpack.c.l.b16 %v1455
      %v1616 = vunpack.c.h.b16 %v1455
      %v1617 = vunpack.c.l.b16 %v1456
      %v1618 = vunpack.c.h.b16 %v1456
      %v1619 = vunpack.c.l.b16 %v1457
      %v1620 = vunpack.c.h.b16 %v1457
      %v1621 = vunpack.c.l.b16 %v1458
      %v1622 = vunpack.c.h.b16 %v1458
      %v1623 = vunpack.c.l.b16 %v1459
      %v1624 = vunpack.c.h.b16 %v1459
      %v1625 = vunpack.c.l.b16 %v1460
      %v1626 = vunpack.c.h.b16 %v1460
      %v1627 = vunpack.c.l.b16 %v1461
      %v1628 = vunpack.c.h.b16 %v1461
      %v1629 = vunpack.c.l.b16 %v1462
      %v1630 = vunpack.c.h.b16 %v1462
      %v1631 = vunpack.c.l.b16 %v1463
      %v1632 = vunpack.c.h.b16 %v1463
      %v1633 = vunpack.c.l.b16 %v1464
      %v1634 = vunpack.c.h.b16 %v1464
      %v1635 = vunpack.c.l.b16 %v1465
      %v1636 = vunpack.c.h.b16 %v1465
      %v1637 = vunpack.c.l.b16 %v1466
      %v1638 = vunpack.c.h.b16 %v1466
      %v1639 = vunpack.c.l.b16 %v1467
      %v1640 = vunpack.c.h.b16 %v1467
      %v1641 = vunpack.c.l.b16 %v1468
      %v1642 = vunpack.c.h.b16 %v1468
      %v1643 = vunpack.c.l.b16 %v1469
      %v1644 = vunpack.c.h.b16 %v1469
      %v1645 = vunpack.c.l.b16 %v1470
      %v1646 = vunpack.c.h.b16 %v1470
      %v1647 = vunpack.c.l.b16 %v1471
      %v1648 = vunpack.c.h.b16 %v1471
      %v1649 = vunpack.c.l.b16 %v1472
      %v1650 = vunpack.c.h.b16 %v1472
      %v1651 = vunpack.c.l.b16 %v1473
      %v1652 = vunpack.c.h.b16 %v1473
      %v1653 = vunpack.c.l.b16 %v1474
      %v1654 = vunpack.c.h.b16 %v1474
      %v1655 = vunpack.c.l.b16 %v1475
      %v1656 = vunpack.c.h.b16 %v1475
      %v1657 = vunpack.c.l.b16 %v1476
      %v1658 = vunpack.c.h.b16 %v1476
      %v1659 = vunpack.c.l.b16 %v1477
      %v1660 = vunpack.c.h.b16 %v1477
      %v1661 = vunpack.c.l.b16 %v1478
      %v1662 = vunpack.c.h.b16 %v1478
      %v1663 = vunpack.c.l.b16 %v1479
      %v1664 = vunpack.c.h.b16 %v1479
      %v1665 = vunpack.c.l.b16 %v1480
      %v1666 = vunpack.c.h.b16 %v1480
      %v1667 = vunpack.c.l.b16 %v1481
      %v1668 = vunpack.c.h.b16 %v1481
      %v1669 = vunpack.c.l.b16 %v1482
      %v1670 = vunpack.c.h.b16 %v1482
      %v1671 = vunpack.c.l.b16 %v1483
      %v1672 = vunpack.c.h.b16 %v1483
      %v1673 = vunpack.c.l.b16 %v1484
      %v1674 = vunpack.c.h.b16 %v1484
      %v1675 = vunpack.c.l.b16 %v1485
      %v1676 = vunpack.c.h.b16 %v1485
      %v1677 = vunpack.c.l.b16 %v1486
      %v1678 = vunpack.c.h.b16 %v1486
      %v1679 = vunpack.c.l.b16 %v1487
      %v1680 = vunpack.c.h.b16 %v1487
      %v1681 = vunpack.c.l.b16 %v1488
      %v1682 = vunpack.c.h.b16 %v1488
      %v1683 = vunpack.c.l.b16 %v1489
      %v1684 = vunpack.c.h.b16 %v1489
      %v1685 = vunpack.c.l.b16 %v1490
      %v1686 = vunpack.c.h.b16 %v1490
      %v1687 = vunpack.c.l.b16 %v1491
      %v1688 = vunpack.c.h.b16 %v1491
      %v1689 = vunpack.c.l.b16 %v1492
      %v1690 = vunpack.c.h.b16 %v1492
      %v1691 = vunpack.c.l.b16 %v1493
      %v1692 = vunpack.c.h.b16 %v1493
      %v1693 = vunpack.c.l.b16 %v1494
      %v1694 = vunpack.c.h.b16 %v1494
      %v1695 = vunpack.c.l.b16 %v1495
      %v1696 = vunpack.c.h.b16 %v1495
      %v1697 = vunpack.c.l.b16 %v1496
      %v1698 = vunpack.c.h.b16 %v1496
      %v1699 = vunpack.c.l.b16 %v1497
      %v1700 = vunpack.c.h.b16 %v1497
      %v1701 = vunpack.c.l.b16 %v1498
      %v1702 = vunpack.c.h.b16 %v1498
      %v1703 = vunpack.c.l.b16 %v1499
      %v1704 = vunpack.c.h.b16 %v1499
      %v1705 = vunpack.c.l.b16 %v1500
      %v1706 = vunpack.c.h.b16 %v1500
      %v1707 = vunpack.c.l.b16 %v1501
      %v1708 = vunpack.c.h.b16 %v1501
      %v1709 = vunpack.c.l.b16 %v1502
      %v1710 = vunpack.c.h.b16 %v1502
      %v1711 = vunpack.c.l.b16 %v1503
      %v1712 = vunpack.c.h.b16 %v1503
      %v1713 = vunpack.c.l.b16 %v1504
      %v1714 = vunpack.c.h.b16 %v1504
      %v1715 = vunpack.c.l.b16 %v1505
      %v1716 = vunpack.c.h.b16 %v1505
      %v1717 = vunpack.c.l.b16 %v1506
      %v1718 = vunpack.c.h.b16 %v1506
      %v1719 = vunpack.c.l.b16 %v1507
      %v1720 = vunpack.c.h.b16 %v1507
      %v1721 = vunpack.c.l.b16 %v1508
      %v1722 = vunpack.c.h.b16 %v1508
      %v1723 = vunpack.c.l.b16 %v1509
      %v1724 = vunpack.c.h.b16 %v1509
      %v1725 = vunpack.c.l.b16 %v1510
      %v1726 = vunpack.c.h.b16 %v1510
      %v1727 = vunpack.c.l.b16 %v1511
      %v1728 = vunpack.c.h.b16 %v1511
      %v1729 = vunpack.c.l.b16 %v1512
      %v1730 = vunpack.c.h.b16 %v1512
      %v1731 = vunpack.c.l.b16 %v1513
      %v1732 = vunpack.c.h.b16 %v1513
      %v1733 = vunpack.c.l.b16 %v1514
      %v1734 = vunpack.c.h.b16 %v1514
      %v1735 = vunpack.c.l.b16 %v1515
      %v1736 = vunpack.c.h.b16 %v1515
      %v1737 = vunpack.c.l.b16 %v1516
      %v1738 = vunpack.c.h.b16 %v1516
      %v1739 = vunpack.c.l.b16 %v1517
      %v1740 = vunpack.c.h.b16 %v1517
      %v1741 = vunpack.c.l.b16 %v1518
      %v1742 = vunpack.c.h.b16 %v1518
      %v1743 = vpack.c.b16 %v1617, %v1615
      %v1744 = vpack.c.b16 %v1618, %v1616
      %v1745 = vpack.c.b16 %v1621, %v1619
      %v1746 = vpack.c.b16 %v1622, %v1620
      %v1747 = vpack.c.b16 %v1625, %v1623
      %v1748 = vpack.c.b16 %v1626, %v1624
      %v1749 = vpack.c.b16 %v1629, %v1627
      %v1750 = vpack.c.b16 %v1630, %v1628
      %v1751 = vpack.c.b16 %v1633, %v1631
      %v1752 = vpack.c.b16 %v1634, %v1632
      %v1753 = vpack.c.b16 %v1637, %v1635
      %v1754 = vpack.c.b16 %v1638, %v1636
      %v1755 = vpack.c.b16 %v1641, %v1639
      %v1756 = vpack.c.b16 %v1642, %v1640
      %v1757 = vpack.c.b16 %v1645, %v1643
      %v1758 = vpack.c.b16 %v1646, %v1644
      %v1759 = vpack.c.b16 %v1649, %v1647
      %v1760 = vpack.c.b16 %v1650, %v1648
      %v1761 = vpack.c.b16 %v1653, %v1651
      %v1762 = vpack.c.b16 %v1654, %v1652
      %v1763 = vpack.c.b16 %v1657, %v1655
      %v1764 = vpack.c.b16 %v1658, %v1656
      %v1765 = vpack.c.b16 %v1661, %v1659
      %v1766 = vpack.c.b16 %v1662, %v1660
      %v1767 = vpack.c.b16 %v1665, %v1663
      %v1768 = vpack.c.b16 %v1666, %v1664
      %v1769 = vpack.c.b16 %v1669, %v1667
      %v1770 = vpack.c.b16 %v1670, %v1668
      %v1771 = vpack.c.b16 %v1673, %v1671
      %v1772 = vpack.c.b16 %v1674, %v1672
      %v1773 = vpack.c.b16 %v1677, %v1675
      %v1774 = vpack.c.b16 %v1678, %v1676
      %v1775 = vpack.c.b16 %v1681, %v1679
      %v1776 = vpack.c.b16 %v1682, %v1680
      %v1777 = vpack.c.b16 %v1685, %v1683
      %v1778 = vpack.c.b16 %v1686, %v1684
      %v1779 = vpack.c.b16 %v1689, %v1687
      %v1780 = vpack.c.b16 %v1690, %v1688
      %v1781 = vpack.c.b16 %v1693, %v1691
      %v1782 = vpack.c.b16 %v1694, %v1692
      %v1783 = vpack.c.b16 %v1697, %v1695
      %v1784 = vpack.c.b16 %v1698, %v1696
      %v1785 = vpack.c.b16 %v1701, %v1699
      %v1786 = vpack.c.b16 %v1702, %v1700
      %v1787 = vpack.c.b16 %v1705, %v1703
      %v1788 = vpack.c.b16 %v1706, %v1704
      %v1789 = vpack.c.b16 %v1709, %v1707
      %v1790 = vpack.c.b16 %v1710, %v1708
      %v1791 = vpack.c.b16 %v1713, %v1711
      %v1792 = vpack.c.b16 %v1714, %v1712
      %v1793 = vpack.c.b16 %v1717, %v1715
      %v1794 = vpack.c.b16 %v1718, %v1716
      %v1795 = vpack.c.b16 %v1721, %v1719
      %v1796 = vpack.c.b16 %v1722, %v1720
      %v1797 = vpack.c.b16 %v1725, %v1723
      %v1798 = vpack.c.b16 %v1726, %v1724
      %v1799 = vpack.c.b16 %v1729, %v1727
      %v1800 = vpack.c.b16 %v1730, %v1728
      %v1801 = vpack.c.b16 %v1733, %v1731
      %v1802 = vpack.c.b16 %v1734, %v1732
      %v1803 = vpack.c.b16 %v1737, %v1735
      %v1804 = vpack.c.b16 %v1738, %v1736
      %v1805 = vpack.c.b16 %v1741, %v1739
      %v1806 = vpack.c.b16 %v1742, %v1740
      %1871 = vmatprep.subr.bf16.mxu0 %v1520
      %1872 = vmatpush1.bf16.msra.mxu0 %v1519
      %1873 = vmatprep.subr.bf16.mxu0 %v1522
      %1874 = vmatpush1.bf16.msra.mxu0 %v1521
      %1875 = vmatprep.subr.bf16.mxu0 %v1524
      %1876 = vmatpush1.bf16.msra.mxu0 %v1523
      %1877 = vmatprep.subr.bf16.mxu0 %v1526
      %1878 = vmatpush1.bf16.msra.mxu0 %v1525
      %1879 = vmatprep.subr.bf16.mxu0 %v1528
      %1880 = vmatpush1.bf16.msra.mxu0 %v1527
      %1881 = vmatprep.subr.bf16.mxu0 %v1530
      %1882 = vmatpush1.bf16.msra.mxu0 %v1529
      %1883 = vmatprep.subr.bf16.mxu0 %v1532
      %1884 = vmatpush1.bf16.msra.mxu0 %v1531
      %1885 = vmatprep.subr.bf16.mxu0 %v1534
      %1886 = vmatpush1.bf16.msra.mxu0 %v1533
      %1887 = vmatprep.subr.bf16.mxu0 %v1536
      %1888 = vmatpush1.bf16.msra.mxu0 %v1535
      %1889 = vmatprep.subr.bf16.mxu0 %v1538
      %1890 = vmatpush1.bf16.msra.mxu0 %v1537
      %1891 = vmatprep.subr.bf16.mxu0 %v1540
      %1892 = vmatpush1.bf16.msra.mxu0 %v1539
      %1893 = vmatprep.subr.bf16.mxu0 %v1542
      %1894 = vmatpush1.bf16.msra.mxu0 %v1541
      %1895 = vmatprep.subr.bf16.mxu0 %v1544
      %1896 = vmatpush1.bf16.msra.mxu0 %v1543
      %1897 = vmatprep.subr.bf16.mxu0 %v1546
      %1898 = vmatpush1.bf16.msra.mxu0 %v1545
      %1899 = vmatprep.subr.bf16.mxu0 %v1548
      %1900 = vmatpush1.bf16.msra.mxu0 %v1547
      %1901 = vmatprep.subr.bf16.mxu0 %v1550
      %1902 = vmatpush1.bf16.msra.mxu0 %v1549
      %1903 = vmatprep.mubr.bf16.mxu0 %v1744
      %1904 = vmatmul.mubr.bf16.gmra.mrb[0].mxu0 %v1743
      %v1905 = vpop.f32.mrb[0].mxu0
      %v1906 = vadd.f32 0.0, %v1905
      %v1907 = vpop.f32.mrb[0].mxu0
      %v1908 = vadd.f32 0.0, %v1907
      %v1909 = vpop.f32.mrb[0].mxu0
      %v1910 = vadd.f32 0.0, %v1909
      %v1911 = vpop.f32.mrb[0].mxu0
      %v1912 = vadd.f32 0.0, %v1911
      %1913 = vmatprep.mubr.bf16.mxu0 %v1746
      %1914 = vmatmul.mubr.bf16.gmra.mrb[0].mxu0 %v1745
      %v1915 = vpop.f32.mrb[0].mxu0
      %v1916 = vadd.f32 0.0, %v1915
      %v1917 = vpop.f32.mrb[0].mxu0
      %v1918 = vadd.f32 0.0, %v1917
      %v1919 = vpop.f32.mrb[0].mxu0
      %v1920 = vadd.f32 0.0, %v1919
      %v1921 = vpop.f32.mrb[0].mxu0
      %v1922 = vadd.f32 0.0, %v1921
      %1923 = vmatprep.mubr.bf16.mxu0 %v1748
      %1924 = vmatmul.mubr.bf16.gmra.mrb[0].mxu0 %v1747
      %v1925 = vpop.f32.mrb[0].mxu0
      %v1926 = vadd.f32 0.0, %v1925
      %v1927 = vpop.f32.mrb[0].mxu0
      %v1928 = vadd.f32 0.0, %v1927
      %v1929 = vpop.f32.mrb[0].mxu0
      %v1930 = vadd.f32 0.0, %v1929
      %v1931 = vpop.f32.mrb[0].mxu0
      %v1932 = vadd.f32 0.0, %v1931
      %1933 = vmatprep.mubr.bf16.mxu0 %v1750
      %1934 = vmatmul.mubr.bf16.gmra.mrb[0].mxu0 %v1749
      %v1935 = vpop.f32.mrb[0].mxu0
      %v1936 = vadd.f32 0.0, %v1935
      %v1937 = vpop.f32.mrb[0].mxu0
      %v1938 = vadd.f32 0.0, %v1937
      %v1939 = vpop.f32.mrb[0].mxu0
      %v1940 = vadd.f32 0.0, %v1939
      %v1941 = vpop.f32.mrb[0].mxu0
      %v1942 = vadd.f32 0.0, %v1941
      %1943 = vmatprep.mubr.bf16.mxu0 %v1752
      %1944 = vmatmul.mubr.bf16.gmra.mrb[0].mxu0 %v1751
      %v1945 = vpop.f32.mrb[0].mxu0
      %v1946 = vadd.f32 0.0, %v1945
      %v1947 = vpop.f32.mrb[0].mxu0
      %v1948 = vadd.f32 0.0, %v1947
      %v1949 = vpop.f32.mrb[0].mxu0
      %v1950 = vadd.f32 0.0, %v1949
      %v1951 = vpop.f32.mrb[0].mxu0
      %v1952 = vadd.f32 0.0, %v1951
      %1953 = vmatprep.mubr.bf16.mxu0 %v1754
      %1954 = vmatmul.mubr.bf16.gmra.mrb[0].mxu0 %v1753
      %v1955 = vpop.f32.mrb[0].mxu0
      %v1956 = vadd.f32 0.0, %v1955
      %v1957 = vpop.f32.mrb[0].mxu0
      %v1958 = vadd.f32 0.0, %v1957
      %v1959 = vpop.f32.mrb[0].mxu0
      %v1960 = vadd.f32 0.0, %v1959
      %v1961 = vpop.f32.mrb[0].mxu0
      %v1962 = vadd.f32 0.0, %v1961
      %1963 = vmatprep.mubr.bf16.mxu0 %v1756
      %1964 = vmatmul.mubr.bf16.gmra.mrb[0].mxu0 %v1755
      %v1965 = vpop.f32.mrb[0].mxu0
      %v1966 = vadd.f32 0.0, %v1965
      %v1967 = vpop.f32.mrb[0].mxu0
      %v1968 = vadd.f32 0.0, %v1967
      %v1969 = vpop.f32.mrb[0].mxu0
      %v1970 = vadd.f32 0.0, %v1969
      %v1971 = vpop.f32.mrb[0].mxu0
      %v1972 = vadd.f32 0.0, %v1971
      %1973 = vmatprep.mubr.bf16.mxu0 %v1758
      %1974 = vmatmul.mubr.bf16.gmra.mrb[0].mxu0 %v1757
      %v1975 = vpop.f32.mrb[0].mxu0
      %v1976 = vadd.f32 0.0, %v1975
      %v1977 = vpop.f32.mrb[0].mxu0
      %v1978 = vadd.f32 0.0, %v1977
      %v1979 = vpop.f32.mrb[0].mxu0
      %v1980 = vadd.f32 0.0, %v1979
      %v1981 = vpop.f32.mrb[0].mxu0
      %v1982 = vadd.f32 0.0, %v1981
      %1983 = vmatprep.mubr.bf16.mxu0 %v1760
      %1984 = vmatmul.mubr.bf16.gmra.mrb[0].mxu0 %v1759
      %v1985 = vpop.f32.mrb[0].mxu0
      %v1986 = vadd.f32 0.0, %v1985
      %v1987 = vpop.f32.mrb[0].mxu0
      %v1988 = vadd.f32 0.0, %v1987
      %v1989 = vpop.f32.mrb[0].mxu0
      %v1990 = vadd.f32 0.0, %v1989
      %v1991 = vpop.f32.mrb[0].mxu0
      %v1992 = vadd.f32 0.0, %v1991
      %1993 = vmatprep.mubr.bf16.mxu0 %v1762
      %1994 = vmatmul.mubr.bf16.gmra.mrb[0].mxu0 %v1761
      %v1995 = vpop.f32.mrb[0].mxu0
      %v1996 = vadd.f32 0.0, %v1995
      %v1997 = vpop.f32.mrb[0].mxu0
      %v1998 = vadd.f32 0.0, %v1997
      %v1999 = vpop.f32.mrb[0].mxu0
      %v2000 = vadd.f32 0.0, %v1999
      %v2001 = vpop.f32.mrb[0].mxu0
      %v2002 = vadd.f32 0.0, %v2001
      %2003 = vmatprep.mubr.bf16.mxu0 %v1764
      %2004 = vmatmul.mubr.bf16.gmra.mrb[0].mxu0 %v1763
      %v2005 = vpop.f32.mrb[0].mxu0
      %v2006 = vadd.f32 0.0, %v2005
      %v2007 = vpop.f32.mrb[0].mxu0
      %v2008 = vadd.f32 0.0, %v2007
      %v2009 = vpop.f32.mrb[0].mxu0
      %v2010 = vadd.f32 0.0, %v2009
      %v2011 = vpop.f32.mrb[0].mxu0
      %v2012 = vadd.f32 0.0, %v2011
      %2013 = vmatprep.mubr.bf16.mxu0 %v1766
      %2014 = vmatmul.mubr.bf16.gmra.mrb[0].mxu0 %v1765
      %v2015 = vpop.f32.mrb[0].mxu0
      %v2016 = vadd.f32 0.0, %v2015
      %v2017 = vpop.f32.mrb[0].mxu0
      %v2018 = vadd.f32 0.0, %v2017
      %v2019 = vpop.f32.mrb[0].mxu0
      %v2020 = vadd.f32 0.0, %v2019
      %v2021 = vpop.f32.mrb[0].mxu0
      %v2022 = vadd.f32 0.0, %v2021
      %2023 = vmatprep.mubr.bf16.mxu0 %v1768
      %2024 = vmatmul.mubr.bf16.gmra.mrb[0].mxu0 %v1767
      %v2025 = vpop.f32.mrb[0].mxu0
      %v2026 = vadd.f32 0.0, %v2025
      %v2027 = vpop.f32.mrb[0].mxu0
      %v2028 = vadd.f32 0.0, %v2027
      %v2029 = vpop.f32.mrb[0].mxu0
      %v2030 = vadd.f32 0.0, %v2029
      %v2031 = vpop.f32.mrb[0].mxu0
      %v2032 = vadd.f32 0.0, %v2031
      %2033 = vmatprep.mubr.bf16.mxu0 %v1770
      %2034 = vmatmul.mubr.bf16.gmra.mrb[0].mxu0 %v1769
      %v2035 = vpop.f32.mrb[0].mxu0
      %v2036 = vadd.f32 0.0, %v2035
      %v2037 = vpop.f32.mrb[0].mxu0
      %v2038 = vadd.f32 0.0, %v2037
      %v2039 = vpop.f32.mrb[0].mxu0
      %v2040 = vadd.f32 0.0, %v2039
      %v2041 = vpop.f32.mrb[0].mxu0
      %v2042 = vadd.f32 0.0, %v2041
      %2043 = vmatprep.mubr.bf16.mxu0 %v1772
      %2044 = vmatmul.mubr.bf16.gmra.mrb[0].mxu0 %v1771
      %v2045 = vpop.f32.mrb[0].mxu0
      %v2046 = vadd.f32 0.0, %v2045
      %v2047 = vpop.f32.mrb[0].mxu0
      %v2048 = vadd.f32 0.0, %v2047
      %v2049 = vpop.f32.mrb[0].mxu0
      %v2050 = vadd.f32 0.0, %v2049
      %v2051 = vpop.f32.mrb[0].mxu0
      %v2052 = vadd.f32 0.0, %v2051
      %2053 = vmatprep.mubr.bf16.mxu0 %v1774
      %2054 = vmatmul.mubr.bf16.gmra.mrb[0].mxu0 %v1773
      %v2055 = vpop.f32.mrb[0].mxu0
      %v2056 = vadd.f32 0.0, %v2055
      %v2057 = vpop.f32.mrb[0].mxu0
      %v2058 = vadd.f32 0.0, %v2057
      %v2059 = vpop.f32.mrb[0].mxu0
      %v2060 = vadd.f32 0.0, %v2059
      %v2061 = vpop.f32.mrb[0].mxu0
      %v2062 = vadd.f32 0.0, %v2061
      %2063 = vmatprep.mubr.bf16.mxu0 %v1776
      %2064 = vmatmul.mubr.bf16.gmra.mrb[0].mxu0 %v1775
      %v2065 = vpop.f32.mrb[0].mxu0
      %v2066 = vadd.f32 0.0, %v2065
      %v2067 = vpop.f32.mrb[0].mxu0
      %v2068 = vadd.f32 0.0, %v2067
      %v2069 = vpop.f32.mrb[0].mxu0
      %v2070 = vadd.f32 0.0, %v2069
      %v2071 = vpop.f32.mrb[0].mxu0
      %v2072 = vadd.f32 0.0, %v2071
      %2073 = vmatprep.mubr.bf16.mxu0 %v1778
      %2074 = vmatmul.mubr.bf16.gmra.mrb[0].mxu0 %v1777
      %v2075 = vpop.f32.mrb[0].mxu0
      %v2076 = vadd.f32 0.0, %v2075
      %v2077 = vpop.f32.mrb[0].mxu0
      %v2078 = vadd.f32 0.0, %v2077
      %v2079 = vpop.f32.mrb[0].mxu0
      %v2080 = vadd.f32 0.0, %v2079
      %v2081 = vpop.f32.mrb[0].mxu0
      %v2082 = vadd.f32 0.0, %v2081
      %2083 = vmatprep.mubr.bf16.mxu0 %v1780
      %2084 = vmatmul.mubr.bf16.gmra.mrb[0].mxu0 %v1779
      %v2085 = vpop.f32.mrb[0].mxu0
      %v2086 = vadd.f32 0.0, %v2085
      %v2087 = vpop.f32.mrb[0].mxu0
      %v2088 = vadd.f32 0.0, %v2087
      %v2089 = vpop.f32.mrb[0].mxu0
      %v2090 = vadd.f32 0.0, %v2089
      %v2091 = vpop.f32.mrb[0].mxu0
      %v2092 = vadd.f32 0.0, %v2091
      %2093 = vmatprep.mubr.bf16.mxu0 %v1782
      %2094 = vmatmul.mubr.bf16.gmra.mrb[0].mxu0 %v1781
      %v2095 = vpop.f32.mrb[0].mxu0
      %v2096 = vadd.f32 0.0, %v2095
      %v2097 = vpop.f32.mrb[0].mxu0
      %v2098 = vadd.f32 0.0, %v2097
      %v2099 = vpop.f32.mrb[0].mxu0
      %v2100 = vadd.f32 0.0, %v2099
      %v2101 = vpop.f32.mrb[0].mxu0
      %v2102 = vadd.f32 0.0, %v2101
      %2103 = vmatprep.mubr.bf16.mxu0 %v1784
      %2104 = vmatmul.mubr.bf16.gmra.mrb[0].mxu0 %v1783
      %v2105 = vpop.f32.mrb[0].mxu0
      %v2106 = vadd.f32 0.0, %v2105
      %v2107 = vpop.f32.mrb[0].mxu0
      %v2108 = vadd.f32 0.0, %v2107
      %v2109 = vpop.f32.mrb[0].mxu0
      %v2110 = vadd.f32 0.0, %v2109
      %v2111 = vpop.f32.mrb[0].mxu0
      %v2112 = vadd.f32 0.0, %v2111
      %2113 = vmatprep.mubr.bf16.mxu0 %v1786
      %2114 = vmatmul.mubr.bf16.gmra.mrb[0].mxu0 %v1785
      %v2115 = vpop.f32.mrb[0].mxu0
      %v2116 = vadd.f32 0.0, %v2115
      %v2117 = vpop.f32.mrb[0].mxu0
      %v2118 = vadd.f32 0.0, %v2117
      %v2119 = vpop.f32.mrb[0].mxu0
      %v2120 = vadd.f32 0.0, %v2119
      %v2121 = vpop.f32.mrb[0].mxu0
      %v2122 = vadd.f32 0.0, %v2121
      %2123 = vmatprep.mubr.bf16.mxu0 %v1788
      %2124 = vmatmul.mubr.bf16.gmra.mrb[0].mxu0 %v1787
      %v2125 = vpop.f32.mrb[0].mxu0
      %v2126 = vadd.f32 0.0, %v2125
      %v2127 = vpop.f32.mrb[0].mxu0
      %v2128 = vadd.f32 0.0, %v2127
      %v2129 = vpop.f32.mrb[0].mxu0
      %v2130 = vadd.f32 0.0, %v2129
      %v2131 = vpop.f32.mrb[0].mxu0
      %v2132 = vadd.f32 0.0, %v2131
      %2133 = vmatprep.mubr.bf16.mxu0 %v1790
      %2134 = vmatmul.mubr.bf16.gmra.mrb[0].mxu0 %v1789
      %v2135 = vpop.f32.mrb[0].mxu0
      %v2136 = vadd.f32 0.0, %v2135
      %v2137 = vpop.f32.mrb[0].mxu0
      %v2138 = vadd.f32 0.0, %v2137
      %v2139 = vpop.f32.mrb[0].mxu0
      %v2140 = vadd.f32 0.0, %v2139
      %v2141 = vpop.f32.mrb[0].mxu0
      %v2142 = vadd.f32 0.0, %v2141
      %2143 = vmatprep.mubr.bf16.mxu0 %v1792
      %2144 = vmatmul.mubr.bf16.gmra.mrb[0].mxu0 %v1791
      %v2145 = vpop.f32.mrb[0].mxu0
      %v2146 = vadd.f32 0.0, %v2145
      %v2147 = vpop.f32.mrb[0].mxu0
      %v2148 = vadd.f32 0.0, %v2147
      %v2149 = vpop.f32.mrb[0].mxu0
      %v2150 = vadd.f32 0.0, %v2149
      %v2151 = vpop.f32.mrb[0].mxu0
      %v2152 = vadd.f32 0.0, %v2151
      %2153 = vmatprep.mubr.bf16.mxu0 %v1794
      %2154 = vmatmul.mubr.bf16.gmra.mrb[0].mxu0 %v1793
      %v2155 = vpop.f32.mrb[0].mxu0
      %v2156 = vadd.f32 0.0, %v2155
      %v2157 = vpop.f32.mrb[0].mxu0
      %v2158 = vadd.f32 0.0, %v2157
      %v2159 = vpop.f32.mrb[0].mxu0
      %v2160 = vadd.f32 0.0, %v2159
      %v2161 = vpop.f32.mrb[0].mxu0
      %v2162 = vadd.f32 0.0, %v2161
      %2163 = vmatprep.mubr.bf16.mxu0 %v1796
      %2164 = vmatmul.mubr.bf16.gmra.mrb[0].mxu0 %v1795
      %v2165 = vpop.f32.mrb[0].mxu0
      %v2166 = vadd.f32 0.0, %v2165
      %v2167 = vpop.f32.mrb[0].mxu0
      %v2168 = vadd.f32 0.0, %v2167
      %v2169 = vpop.f32.mrb[0].mxu0
      %v2170 = vadd.f32 0.0, %v2169
      %v2171 = vpop.f32.mrb[0].mxu0
      %v2172 = vadd.f32 0.0, %v2171
      %2173 = vmatprep.mubr.bf16.mxu0 %v1798
      %2174 = vmatmul.mubr.bf16.gmra.mrb[0].mxu0 %v1797
      %v2175 = vpop.f32.mrb[0].mxu0
      %v2176 = vadd.f32 0.0, %v2175
      %v2177 = vpop.f32.mrb[0].mxu0
      %v2178 = vadd.f32 0.0, %v2177
      %v2179 = vpop.f32.mrb[0].mxu0
      %v2180 = vadd.f32 0.0, %v2179
      %v2181 = vpop.f32.mrb[0].mxu0
      %v2182 = vadd.f32 0.0, %v2181
      %2183 = vmatprep.mubr.bf16.mxu0 %v1800
      %2184 = vmatmul.mubr.bf16.gmra.mrb[0].mxu0 %v1799
      %v2185 = vpop.f32.mrb[0].mxu0
      %v2186 = vadd.f32 0.0, %v2185
      %v2187 = vpop.f32.mrb[0].mxu0
      %v2188 = vadd.f32 0.0, %v2187
      %v2189 = vpop.f32.mrb[0].mxu0
      %v2190 = vadd.f32 0.0, %v2189
      %v2191 = vpop.f32.mrb[0].mxu0
      %v2192 = vadd.f32 0.0, %v2191
      %2193 = vmatprep.mubr.bf16.mxu0 %v1802
      %2194 = vmatmul.mubr.bf16.gmra.mrb[0].mxu0 %v1801
      %v2195 = vpop.f32.mrb[0].mxu0
      %v2196 = vadd.f32 0.0, %v2195
      %v2197 = vpop.f32.mrb[0].mxu0
      %v2198 = vadd.f32 0.0, %v2197
      %v2199 = vpop.f32.mrb[0].mxu0
      %v2200 = vadd.f32 0.0, %v2199
      %v2201 = vpop.f32.mrb[0].mxu0
      %v2202 = vadd.f32 0.0, %v2201
      %2203 = vmatprep.mubr.bf16.mxu0 %v1804
      %2204 = vmatmul.mubr.bf16.gmra.mrb[0].mxu0 %v1803
      %v2205 = vpop.f32.mrb[0].mxu0
      %v2206 = vadd.f32 0.0, %v2205
      %v2207 = vpop.f32.mrb[0].mxu0
      %v2208 = vadd.f32 0.0, %v2207
      %v2209 = vpop.f32.mrb[0].mxu0
      %v2210 = vadd.f32 0.0, %v2209
      %v2211 = vpop.f32.mrb[0].mxu0
      %v2212 = vadd.f32 0.0, %v2211
      %2213 = vmatprep.mubr.bf16.mxu0 %v1806
      %2214 = vmatmul.mubr.bf16.gmra.mrb[0].mxu0 %v1805
      %v2215 = vpop.f32.mrb[0].mxu0
      %v2216 = vadd.f32 0.0, %v2215
      %v2217 = vpop.f32.mrb[0].mxu0
      %v2218 = vadd.f32 0.0, %v2217
      %v2219 = vpop.f32.mrb[0].mxu0
      %v2220 = vadd.f32 0.0, %v2219
      %v2221 = vpop.f32.mrb[0].mxu0
      %v2222 = vadd.f32 0.0, %v2221
      %2223 = vdwg.mxu0
      %2224 = vst [vmem:[%s204] sm:$0xff] %v1906
      %2225 = vst.msk [vmem:[%s204 + $0x8] sm:$0xff] %vm270, %v1908
      %2226 = vst [vmem:[%s204 + $0x10] sm:$0xff] %v1910
      %2227 = vst.msk [vmem:[%s204 + $0x18] sm:$0xff] %vm270, %v1912
      %2228 = vst [vmem:[%s204 + $0x20] sm:$0xff] %v1916
      %2229 = vst.msk [vmem:[%s204 + $0x28] sm:$0xff] %vm270, %v1918
      %2230 = vst [vmem:[%s204 + $0x30] sm:$0xff] %v1920
      %2231 = vst.msk [vmem:[%s204 + $0x38] sm:$0xff] %vm270, %v1922
      %2232 = vst [vmem:[%s204 + $0x40] sm:$0xff] %v1926
      %2233 = vst.msk [vmem:[%s204 + $0x48] sm:$0xff] %vm270, %v1928
      %2234 = vst [vmem:[%s204 + $0x50] sm:$0xff] %v1930
      %2235 = vst.msk [vmem:[%s204 + $0x58] sm:$0xff] %vm270, %v1932
      %2236 = vst [vmem:[%s204 + $0x60] sm:$0xff] %v1936
      %2237 = vst.msk [vmem:[%s204 + $0x68] sm:$0xff] %vm270, %v1938
      %2238 = vst [vmem:[%s204 + $0x70] sm:$0xff] %v1940
      %2239 = vst.msk [vmem:[%s204 + $0x78] sm:$0xff] %vm270, %v1942
      %2240 = vst [vmem:[%s204 + $0x80] sm:$0xff] %v1946
      %2241 = vst.msk [vmem:[%s204 + $0x88] sm:$0xff] %vm270, %v1948
      %2242 = vst [vmem:[%s204 + $0x90] sm:$0xff] %v1950
      %2243 = vst.msk [vmem:[%s204 + $0x98] sm:$0xff] %vm270, %v1952
      %2244 = vst [vmem:[%s204 + $0xa0] sm:$0xff] %v1956
      %2245 = vst.msk [vmem:[%s204 + $0xa8] sm:$0xff] %vm270, %v1958
      %2246 = vst [vmem:[%s204 + $0xb0] sm:$0xff] %v1960
      %2247 = vst.msk [vmem:[%s204 + $0xb8] sm:$0xff] %vm270, %v1962
      %2248 = vst [vmem:[%s204 + $0xc0] sm:$0xff] %v1966
      %2249 = vst.msk [vmem:[%s204 + $0xc8] sm:$0xff] %vm270, %v1968
      %2250 = vst [vmem:[%s204 + $0xd0] sm:$0xff] %v1970
      %2251 = vst.msk [vmem:[%s204 + $0xd8] sm:$0xff] %vm270, %v1972
      %2252 = vst [vmem:[%s204 + $0xe0] sm:$0xff] %v1976
      %2253 = vst.msk [vmem:[%s204 + $0xe8] sm:$0xff] %vm270, %v1978
      %2254 = vst [vmem:[%s204 + $0xf0] sm:$0xff] %v1980
      %2255 = vst.msk [vmem:[%s204 + $0xf8] sm:$0xff] %vm270, %v1982
      %2256 = vst [vmem:[%s204 + $0x100] sm:$0xff] %v1986
      %2257 = vst.msk [vmem:[%s204 + $0x108] sm:$0xff] %vm270, %v1988
      %2258 = vst [vmem:[%s204 + $0x110] sm:$0xff] %v1990
      %2259 = vst.msk [vmem:[%s204 + $0x118] sm:$0xff] %vm270, %v1992
      %2260 = vst [vmem:[%s204 + $0x120] sm:$0xff] %v1996
      %2261 = vst.msk [vmem:[%s204 + $0x128] sm:$0xff] %vm270, %v1998
      %2262 = vst [vmem:[%s204 + $0x130] sm:$0xff] %v2000
      %2263 = vst.msk [vmem:[%s204 + $0x138] sm:$0xff] %vm270, %v2002
      %2264 = vst [vmem:[%s204 + $0x140] sm:$0xff] %v2006
      %2265 = vst.msk [vmem:[%s204 + $0x148] sm:$0xff] %vm270, %v2008
      %2266 = vst [vmem:[%s204 + $0x150] sm:$0xff] %v2010
      %2267 = vst.msk [vmem:[%s204 + $0x158] sm:$0xff] %vm270, %v2012
      %2268 = vst [vmem:[%s204 + $0x160] sm:$0xff] %v2016
      %2269 = vst.msk [vmem:[%s204 + $0x168] sm:$0xff] %vm270, %v2018
      %2270 = vst [vmem:[%s204 + $0x170] sm:$0xff] %v2020
      %2271 = vst.msk [vmem:[%s204 + $0x178] sm:$0xff] %vm270, %v2022
      %2272 = vst [vmem:[%s204 + $0x180] sm:$0xff] %v2026
      %2273 = vst.msk [vmem:[%s204 + $0x188] sm:$0xff] %vm270, %v2028
      %2274 = vst [vmem:[%s204 + $0x190] sm:$0xff] %v2030
      %2275 = vst.msk [vmem:[%s204 + $0x198] sm:$0xff] %vm270, %v2032
      %2276 = vst [vmem:[%s204 + $0x1a0] sm:$0xff] %v2036
      %2277 = vst.msk [vmem:[%s204 + $0x1a8] sm:$0xff] %vm270, %v2038
      %2278 = vst [vmem:[%s204 + $0x1b0] sm:$0xff] %v2040
      %2279 = vst.msk [vmem:[%s204 + $0x1b8] sm:$0xff] %vm270, %v2042
      %2280 = vst [vmem:[%s204 + $0x1c0] sm:$0xff] %v2046
      %2281 = vst.msk [vmem:[%s204 + $0x1c8] sm:$0xff] %vm270, %v2048
      %2282 = vst [vmem:[%s204 + $0x1d0] sm:$0xff] %v2050
      %2283 = vst.msk [vmem:[%s204 + $0x1d8] sm:$0xff] %vm270, %v2052
      %2284 = vst [vmem:[%s204 + $0x1e0] sm:$0xff] %v2056
      %2285 = vst.msk [vmem:[%s204 + $0x1e8] sm:$0xff] %vm270, %v2058
      %2286 = vst [vmem:[%s204 + $0x1f0] sm:$0xff] %v2060
      %2287 = vst.msk [vmem:[%s204 + $0x1f8] sm:$0xff] %vm270, %v2062
      %2288 = vst [vmem:[%s204 + $0x200] sm:$0xff] %v2066
      %2289 = vst.msk [vmem:[%s204 + $0x208] sm:$0xff] %vm270, %v2068
      %2290 = vst [vmem:[%s204 + $0x210] sm:$0xff] %v2070
      %2291 = vst.msk [vmem:[%s204 + $0x218] sm:$0xff] %vm270, %v2072
      %2292 = vst [vmem:[%s204 + $0x220] sm:$0xff] %v2076
      %2293 = vst.msk [vmem:[%s204 + $0x228] sm:$0xff] %vm270, %v2078
      %2294 = vst [vmem:[%s204 + $0x230] sm:$0xff] %v2080
      %2295 = vst.msk [vmem:[%s204 + $0x238] sm:$0xff] %vm270, %v2082
      %2296 = vst [vmem:[%s204 + $0x240] sm:$0xff] %v2086
      %2297 = vst.msk [vmem:[%s204 + $0x248] sm:$0xff] %vm270, %v2088
      %2298 = vst [vmem:[%s204 + $0x250] sm:$0xff] %v2090
      %2299 = vst.msk [vmem:[%s204 + $0x258] sm:$0xff] %vm270, %v2092
      %2300 = vst [vmem:[%s204 + $0x260] sm:$0xff] %v2096
      %2301 = vst.msk [vmem:[%s204 + $0x268] sm:$0xff] %vm270, %v2098
      %2302 = vst [vmem:[%s204 + $0x270] sm:$0xff] %v2100
      %2303 = vst.msk [vmem:[%s204 + $0x278] sm:$0xff] %vm270, %v2102
      %2304 = vst [vmem:[%s204 + $0x280] sm:$0xff] %v2106
      %2305 = vst.msk [vmem:[%s204 + $0x288] sm:$0xff] %vm270, %v2108
      %2306 = vst [vmem:[%s204 + $0x290] sm:$0xff] %v2110
      %2307 = vst.msk [vmem:[%s204 + $0x298] sm:$0xff] %vm270, %v2112
      %2308 = vst [vmem:[%s204 + $0x2a0] sm:$0xff] %v2116
      %2309 = vst.msk [vmem:[%s204 + $0x2a8] sm:$0xff] %vm270, %v2118
      %2310 = vst [vmem:[%s204 + $0x2b0] sm:$0xff] %v2120
      %2311 = vst.msk [vmem:[%s204 + $0x2b8] sm:$0xff] %vm270, %v2122
      %2312 = vst [vmem:[%s204 + $0x2c0] sm:$0xff] %v2126
      %2313 = vst.msk [vmem:[%s204 + $0x2c8] sm:$0xff] %vm270, %v2128
      %2314 = vst [vmem:[%s204 + $0x2d0] sm:$0xff] %v2130
      %2315 = vst.msk [vmem:[%s204 + $0x2d8] sm:$0xff] %vm270, %v2132
      %2316 = vst [vmem:[%s204 + $0x2e0] sm:$0xff] %v2136
      %2317 = vst.msk [vmem:[%s204 + $0x2e8] sm:$0xff] %vm270, %v2138
      %2318 = vst [vmem:[%s204 + $0x2f0] sm:$0xff] %v2140
      %2319 = vst.msk [vmem:[%s204 + $0x2f8] sm:$0xff] %vm270, %v2142
      %2320 = vst [vmem:[%s204 + $0x300] sm:$0xff] %v2146
      %2321 = vst.msk [vmem:[%s204 + $0x308] sm:$0xff] %vm270, %v2148
      %2322 = vst [vmem:[%s204 + $0x310] sm:$0xff] %v2150
      %2323 = vst.msk [vmem:[%s204 + $0x318] sm:$0xff] %vm270, %v2152
      %2324 = vst [vmem:[%s204 + $0x320] sm:$0xff] %v2156
      %2325 = vst.msk [vmem:[%s204 + $0x328] sm:$0xff] %vm270, %v2158
      %2326 = vst [vmem:[%s204 + $0x330] sm:$0xff] %v2160
      %2327 = vst.msk [vmem:[%s204 + $0x338] sm:$0xff] %vm270, %v2162
      %2328 = vst [vmem:[%s204 + $0x340] sm:$0xff] %v2166
      %2329 = vst.msk [vmem:[%s204 + $0x348] sm:$0xff] %vm270, %v2168
      %2330 = vst [vmem:[%s204 + $0x350] sm:$0xff] %v2170
      %2331 = vst.msk [vmem:[%s204 + $0x358] sm:$0xff] %vm270, %v2172
      %2332 = vst [vmem:[%s204 + $0x360] sm:$0xff] %v2176
      %2333 = vst.msk [vmem:[%s204 + $0x368] sm:$0xff] %vm270, %v2178
      %2334 = vst [vmem:[%s204 + $0x370] sm:$0xff] %v2180
      %2335 = vst.msk [vmem:[%s204 + $0x378] sm:$0xff] %vm270, %v2182
      %2336 = vst [vmem:[%s204 + $0x380] sm:$0xff] %v2186
      %2337 = vst.msk [vmem:[%s204 + $0x388] sm:$0xff] %vm270, %v2188
      %2338 = vst [vmem:[%s204 + $0x390] sm:$0xff] %v2190
      %2339 = vst.msk [vmem:[%s204 + $0x398] sm:$0xff] %vm270, %v2192
      %2340 = vst [vmem:[%s204 + $0x3a0] sm:$0xff] %v2196
      %2341 = vst.msk [vmem:[%s204 + $0x3a8] sm:$0xff] %vm270, %v2198
      %2342 = vst [vmem:[%s204 + $0x3b0] sm:$0xff] %v2200
      %2343 = vst.msk [vmem:[%s204 + $0x3b8] sm:$0xff] %vm270, %v2202
      %2344 = vst [vmem:[%s204 + $0x3c0] sm:$0xff] %v2206
      %2345 = vst.msk [vmem:[%s204 + $0x3c8] sm:$0xff] %vm270, %v2208
      %2346 = vst [vmem:[%s204 + $0x3d0] sm:$0xff] %v2210
      %2347 = vst.msk [vmem:[%s204 + $0x3d8] sm:$0xff] %vm270, %v2212
      %2348 = vst [vmem:[%s204 + $0x3e0] sm:$0xff] %v2216
      %2349 = vst.msk [vmem:[%s204 + $0x3e8] sm:$0xff] %vm270, %v2218
      %2350 = vst [vmem:[%s204 + $0x3f0] sm:$0xff] %v2220
      %2351 = vst.msk [vmem:[%s204 + $0x3f8] sm:$0xff] %vm270, %v2222
      %s2352 = smul.u32 64, %s15
      %p2353 = scmp.lt.s32.totalorder %s2352, 127
      %s2354 = scalar_select %p2353, %s2352, 127
      %s2355 = smul.addr %s2354, 2
      %s2356 = smul.addr %s2355, 8
      %s2357 = scalar_lea.vmem %s4, %s2356
      // Predicated region
      $region37: #{bn_relu_conv1x1.1} parent=35 // pred_check
        %p2358 = pneg %p122
      $region38: #{bn_relu_conv1x1.1} parent=35 // pred_check_branch
        %2360 = sbr.rel (%p2358) target = $region40
      $region39: #{bn_relu_conv1x1.1} parent=35 // pred_region
        %s2361 = smul.u32 64, %s15
      $region40: #{bn_relu_conv1x1.1} parent=35 // pred_fallthru
        _
    $region36: #{bn_relu_conv1x1.1} parent=5 // pred_fallthru
      _
    %p2362 = scmp.le.s32.totalorder 2, %s10
    // Predicated region
    $region41: #{bn_relu_conv1x1.1} parent=5 // pred_check
      %p2363 = pneg %p2362
    $region42: #{bn_relu_conv1x1.1} parent=5 // pred_check_branch
      %2365 = sbr.rel (%p2363) target = $region44
    $region43: #{bn_relu_conv1x1.1} parent=5 // pred_region
      %s2366 = ssub.s32 %s10, 2
      // Predicated region
      $region45: #{bn_relu_conv1x1.1} parent=43 // pred_check
        %p2367 = pneg %p128
      $region46: #{bn_relu_conv1x1.1} parent=43 // pred_check_branch
        %2369 = sbr.rel (%p2367) target = $region48
      $region47: #{bn_relu_conv1x1.1} parent=43 // pred_region
        %s2370 = smul.u32 64, %s16
        %p2371 = scmp.lt.s32.totalorder %s2370, 127
        %s2372 = scalar_select %p2371, %s2370, 127
        %s2373 = smul.addr %s2372, 2
        %s2374 = smul.addr %s2373, 8
        %s2375 = scalar_lea.vmem %s4, %s2374
      $region48: #{bn_relu_conv1x1.1} parent=43 // pred_fallthru
        _
    $region44: #{bn_relu_conv1x1.1} parent=5 // pred_fallthru
      _
  $region6: #{bn_relu_conv1x1.1} parent=0 // loop_footer
    %s14 = sadd.s32 1, %s10
  $region7: #{bn_relu_conv1x1.1} parent=0 // loop_footer_branch
    %9 = sbr.rel target = $region3
  $region8: #{bn_relu_conv1x1.1} parent=0 // loop_exit
    _

</llo_original>
